<compile_context>
chip_gen: v7x
topology: tpu7x:2x2x1
jax: 0.10.0
libtpu: 0.0.40
codegen_flags: <defaults>
</compile_context>

<pallas_src>
import jax
import jax.numpy as jnp
from jax.experimental import pallas as pl
from jax.experimental.pallas import tpu as pltpu

# ---------------- model hyperparameters (small, consistent w/ module) -------
B = 2          # batch
S = 8          # src_seq_len
D = 32         # d_model
F = 64         # d_ff
NHEAD = 4
HD = D // NHEAD
EPS = 1e-5
VEC_W = 128    # lane width of the packed small-vector slab


def _layernorm(v, gamma, beta):
    mu = jnp.mean(v, axis=-1, keepdims=True)
    var = jnp.mean((v - mu) ** 2, axis=-1, keepdims=True)
    return (v - mu) * jax.lax.rsqrt(var + EPS) * gamma + beta


def encoder_layer_kernel(x_ref, mask_ref, wqkv_ref, wo_ref, w1_ref, w2_ref,
                         vec_ref, out_ref, attn_scratch):
    x = x_ref[...]                                   # [B*S, D]
    vecs = vec_ref[...]                              # [8, 128] packed vectors
    bqkv = vecs[0:1, :3 * D]                         # [1, 3D]
    bo = vecs[1:2, :D]
    b1 = vecs[2:3, :F]
    b2 = vecs[3:4, :D]
    g1, be1 = vecs[4:5, :D], vecs[5:6, :D]
    g2, be2 = vecs[6:7, :D], vecs[7:8, :D]

    # ---- fused QKV projection on flattened batch*seq rows -----------------
    # (Wq / bq are pre-scaled by 1/sqrt(HD) at pack time.)
    qkv = jnp.dot(x, wqkv_ref[...], preferred_element_type=jnp.float32) + bqkv
    q, k, v = qkv[:, :D], qkv[:, D:2 * D], qkv[:, 2 * D:]

    # ---- multi-head self attention, per batch (static loops, tiny) --------
    for b in range(B):
        r0, r1 = b * S, (b + 1) * S
        q_b, v_b = q[r0:r1], v[r0:r1]
        kT_b = k[r0:r1].T                            # one transpose per batch, [D, S]
        neg_b = mask_ref[b:b + 1, :] * jnp.float32(-1e9)   # [1, S] additive mask
        for h in range(NHEAD):
            lo = h * HD
            s = jnp.dot(q_b[:, lo:lo + HD], kT_b[lo:lo + HD, :],
                        preferred_element_type=jnp.float32)   # [S, S]
            s = s + neg_b
            s = s - jnp.max(s, axis=-1, keepdims=True)
            p = jnp.exp(s)
            p = p * pl.reciprocal(jnp.sum(p, axis=-1, keepdims=True), approx=True)
            # write head output straight into its final lane position
            attn_scratch[r0:r1, lo:lo + HD] = jnp.dot(
                p, v_b[:, lo:lo + HD], preferred_element_type=jnp.float32)

    attn_out = jnp.dot(attn_scratch[...], wo_ref[...],
                       preferred_element_type=jnp.float32) + bo

    # ---- residual + norm1 --------------------------------------------------
    # TODO(synk): dropout omitted (eval-mode identity)
    h1 = _layernorm(x + attn_out, g1, be1)

    # ---- feed forward ------------------------------------------------------
    ff = jnp.dot(h1, w1_ref[...], preferred_element_type=jnp.float32) + b1
    ff = jnp.maximum(ff, 0.0)
    ff = jnp.dot(ff, w2_ref[...], preferred_element_type=jnp.float32) + b2

    # ---- residual + norm2 --------------------------------------------------
    out_ref[...] = _layernorm(h1 + ff, g2, be2).astype(out_ref.dtype)


def pack_params(params):
    """Fuse QKV, fold the attention scale into Wq, pack small vectors."""
    (wq, bq, wk, bk, wv, bv, wo, bo, w1, b1, w2, b2, g1, be1, g2, be2) = params
    scale = jnp.float32(1.0 / (HD ** 0.5))
    wqkv = jnp.concatenate([wq * scale, wk, wv], axis=1)      # [D, 3D]
    bqkv = jnp.concatenate([bq * scale, bk, bv], axis=1)      # [1, 3D]

    def row(vv):
        vv = vv.reshape(1, -1)
        return jnp.pad(vv, ((0, 0), (0, VEC_W - vv.shape[1])))

    vec_pack = jnp.concatenate(
        [row(bqkv), row(bo), row(b1), row(b2),
         row(g1), row(be1), row(g2), row(be2)], axis=0)       # [8, 128]
    return wqkv, wo, w1, w2, vec_pack


def transformer_encoder_layer(src, key_padding_mask, packed_params):
    """src: [B,S,D] f32; key_padding_mask: [B,S] bool (True = padding)."""
    wqkv, wo, w1, w2, vec_pack = packed_params
    src_flat = src.reshape(B * S, D)
    mask_f = key_padding_mask.astype(jnp.float32)             # [B, S]

    full = lambda shape: pl.BlockSpec(shape, lambda i: (0,) * len(shape))

    out = pl.pallas_call(
        encoder_layer_kernel,
        out_shape=jax.ShapeDtypeStruct((B * S, D), jnp.float32),
        grid_spec=pltpu.PrefetchScalarGridSpec(
            num_scalar_prefetch=0,
            grid=(1,),
            in_specs=[
                full((B * S, D)),       # src (flattened)
                full((B, S)),           # key padding mask
                full((D, 3 * D)),       # fused Wqkv
                full((D, D)),           # Wo
                full((D, F)),           # W1
                full((F, D)),           # W2
                full((8, VEC_W)),       # packed biases / LN params
            ],
            out_specs=full((B * S, D)),
            scratch_shapes=[pltpu.VMEM((B * S, D), jnp.float32)],
        ),
        compiler_params=pltpu.CompilerParams(
            dimension_semantics=("arbitrary",)),
    )(src_flat, mask_f, wqkv, wo, w1, w2, vec_pack)
    return out.reshape(B, S, D)


def init_params(key):
    ks = jax.random.split(key, 6)
    sc = 0.05
    wq = sc * jax.random.normal(ks[0], (D, D), jnp.float32)
    wk = sc * jax.random.normal(ks[1], (D, D), jnp.float32)
    wv = sc * jax.random.normal(ks[2], (D, D), jnp.float32)
    wo = sc * jax.random.normal(ks[3], (D, D), jnp.float32)
    w1 = sc * jax.random.normal(ks[4], (D, F), jnp.float32)
    w2 = sc * jax.random.normal(ks[5], (F, D), jnp.float32)
    bq = jnp.zeros((1, D), jnp.float32)
    bk = jnp.zeros((1, D), jnp.float32)
    bv = jnp.zeros((1, D), jnp.float32)
    bo = jnp.zeros((1, D), jnp.float32)
    b1 = jnp.zeros((1, F), jnp.float32)
    b2 = jnp.zeros((1, D), jnp.float32)
    g1 = jnp.ones((1, D), jnp.float32)
    be1 = jnp.zeros((1, D), jnp.float32)
    g2 = jnp.ones((1, D), jnp.float32)
    be2 = jnp.zeros((1, D), jnp.float32)
    return (wq, bq, wk, bk, wv, bv, wo, bo, w1, b1, w2, b2, g1, be1, g2, be2)


def reference(src, key_padding_mask, params):
    (wq, bq, wk, bk, wv, bv, wo, bo, w1, b1, w2, b2, g1, be1, g2, be2) = params
    x = src
    q = x @ wq + bq
    k = x @ wk + bk
    v = x @ wv + bv
    qh = q.reshape(B, S, NHEAD, HD).transpose(0, 2, 1, 3)
    kh = k.reshape(B, S, NHEAD, HD).transpose(0, 2, 1, 3)
    vh = v.reshape(B, S, NHEAD, HD).transpose(0, 2, 1, 3)
    s = jnp.einsum('bhqd,bhkd->bhqk', qh, kh) / (HD ** 0.5)
    s = s + (key_padding_mask.astype(jnp.float32) * -1e9)[:, None, None, :]
    p = jax.nn.softmax(s, axis=-1)
    a = jnp.einsum('bhqk,bhkd->bhqd', p, vh).transpose(0, 2, 1, 3).reshape(B, S, D)
    attn_out = a @ wo + bo

    def ln(v_, g, b):
        mu = v_.mean(-1, keepdims=True)
        var = ((v_ - mu) ** 2).mean(-1, keepdims=True)
        return (v_ - mu) / jnp.sqrt(var + EPS) * g + b

    h1 = ln(x + attn_out, g1, be1)
    ff = jnp.maximum(h1 @ w1 + b1, 0.0) @ w2 + b2
    return ln(h1 + ff, g2, be2)


if __name__ == "__main__":
    key = jax.random.PRNGKey(0)
    k_src, k_p = jax.random.split(key)
    src = jax.random.normal(k_src, (B, S, D), jnp.float32)
    # last two tokens of batch 1 are padding
    key_padding_mask = jnp.zeros((B, S), dtype=bool).at[1, -2:].set(True)
    params = init_params(k_p)
    packed = pack_params(params)

    out = transformer_encoder_layer(src, key_padding_mask, packed)
    out = jax.block_until_ready(out)

    ref = reference(src, key_padding_mask, params)
    # tolerance covers the EUP approx-reciprocal in the softmax denominator
    assert jnp.allclose(out, ref, atol=1e-3, rtol=1e-3), "mismatch vs JAX reference"
    print("KERNEL_OK")
</pallas_src>

<mosaic_0001>
module attributes {stable_mosaic.version = 11 : i64} {
  func.func @encoder_layer_kernel(%arg0: i32, %arg1: memref<16x32xf32, #tpu.memory_space<vmem>>, %arg2: memref<2x8xf32, #tpu.memory_space<vmem>>, %arg3: memref<32x96xf32, #tpu.memory_space<vmem>>, %arg4: memref<32x32xf32, #tpu.memory_space<vmem>>, %arg5: memref<32x64xf32, #tpu.memory_space<vmem>>, %arg6: memref<64x32xf32, #tpu.memory_space<vmem>>, %arg7: memref<8x128xf32, #tpu.memory_space<vmem>>, %arg8: memref<16x32xf32, #tpu.memory_space<vmem>>, %arg9: memref<16x32xf32, #tpu.memory_space<vmem>>) attributes {dimension_semantics = [#tpu.dimension_semantics<arbitrary>], iteration_bounds = array<i64: 1>, scalar_prefetch = 0 : i64, scratch_operands = 1 : i64, tpu.core_type = #tpu.core_type<tc>, window_params = [{pipeline_mode = #tpu.pipeline_mode<synchronous>, transform_indices = @transform_0, window_bounds = array<i64: 16, 32>}, {pipeline_mode = #tpu.pipeline_mode<synchronous>, transform_indices = @transform_1, window_bounds = array<i64: 2, 8>}, {pipeline_mode = #tpu.pipeline_mode<synchronous>, transform_indices = @transform_2, window_bounds = array<i64: 32, 96>}, {pipeline_mode = #tpu.pipeline_mode<synchronous>, transform_indices = @transform_3, window_bounds = array<i64: 32, 32>}, {pipeline_mode = #tpu.pipeline_mode<synchronous>, transform_indices = @transform_4, window_bounds = array<i64: 32, 64>}, {pipeline_mode = #tpu.pipeline_mode<synchronous>, transform_indices = @transform_5, window_bounds = array<i64: 64, 32>}, {pipeline_mode = #tpu.pipeline_mode<synchronous>, transform_indices = @transform_6, window_bounds = array<i64: 8, 128>}, {pipeline_mode = #tpu.pipeline_mode<synchronous>, transform_indices = @transform_7, window_bounds = array<i64: 16, 32>}]} {
    %c0 = arith.constant 0 : index
    %c0_0 = arith.constant 0 : index
    %0 = vector.load %arg1[%c0, %c0_0] : memref<16x32xf32, #tpu.memory_space<vmem>>, vector<16x32xf32>
    %c0_1 = arith.constant 0 : index
    %c0_2 = arith.constant 0 : index
    %1 = vector.load %arg7[%c0_1, %c0_2] : memref<8x128xf32, #tpu.memory_space<vmem>>, vector<8x128xf32>
    %2 = vector.extract_strided_slice %1 {offsets = [0, 0], sizes = [1, 96], strides = [1, 1]} : vector<8x128xf32> to vector<1x96xf32>
    %3 = vector.extract_strided_slice %1 {offsets = [1, 0], sizes = [1, 32], strides = [1, 1]} : vector<8x128xf32> to vector<1x32xf32>
    %4 = vector.extract_strided_slice %1 {offsets = [2, 0], sizes = [1, 64], strides = [1, 1]} : vector<8x128xf32> to vector<1x64xf32>
    %5 = vector.extract_strided_slice %1 {offsets = [3, 0], sizes = [1, 32], strides = [1, 1]} : vector<8x128xf32> to vector<1x32xf32>
    %6 = vector.extract_strided_slice %1 {offsets = [4, 0], sizes = [1, 32], strides = [1, 1]} : vector<8x128xf32> to vector<1x32xf32>
    %7 = vector.extract_strided_slice %1 {offsets = [5, 0], sizes = [1, 32], strides = [1, 1]} : vector<8x128xf32> to vector<1x32xf32>
    %8 = vector.extract_strided_slice %1 {offsets = [6, 0], sizes = [1, 32], strides = [1, 1]} : vector<8x128xf32> to vector<1x32xf32>
    %9 = vector.extract_strided_slice %1 {offsets = [7, 0], sizes = [1, 32], strides = [1, 1]} : vector<8x128xf32> to vector<1x32xf32>
    %c0_3 = arith.constant 0 : index
    %c0_4 = arith.constant 0 : index
    %10 = vector.load %arg3[%c0_3, %c0_4] : memref<32x96xf32, #tpu.memory_space<vmem>>, vector<32x96xf32>
    %cst = arith.constant dense<0.000000e+00> : vector<16x96xf32>
    %11 = tpu.matmul %0, %10, %cst {dimension_numbers = #tpu.dot_dimension_numbers<[1], [0], [0], [1], [0, 0, 1, 1], [], []>} : vector<16x32xf32>, vector<32x96xf32>, vector<16x96xf32> -> vector<16x96xf32>
    %12 = vector.broadcast %2 : vector<1x96xf32> to vector<16x96xf32>
    %13 = arith.addf %11, %12 : vector<16x96xf32>
    %14 = vector.extract_strided_slice %13 {offsets = [0, 0], sizes = [16, 32], strides = [1, 1]} : vector<16x96xf32> to vector<16x32xf32>
    %15 = vector.extract_strided_slice %13 {offsets = [0, 32], sizes = [16, 32], strides = [1, 1]} : vector<16x96xf32> to vector<16x32xf32>
    %16 = vector.extract_strided_slice %13 {offsets = [0, 64], sizes = [16, 32], strides = [1, 1]} : vector<16x96xf32> to vector<16x32xf32>
    %17 = vector.extract_strided_slice %14 {offsets = [0, 0], sizes = [8, 32], strides = [1, 1]} : vector<16x32xf32> to vector<8x32xf32>
    %18 = vector.extract_strided_slice %16 {offsets = [0, 0], sizes = [8, 32], strides = [1, 1]} : vector<16x32xf32> to vector<8x32xf32>
    %19 = vector.extract_strided_slice %15 {offsets = [0, 0], sizes = [8, 32], strides = [1, 1]} : vector<16x32xf32> to vector<8x32xf32>
    %20 = tpu.transpose %19, [1, 0] : vector<8x32xf32> -> vector<32x8xf32>
    %c0_5 = arith.constant 0 : index
    %c0_6 = arith.constant 0 : index
    %21 = vector.load %arg2[%c0_5, %c0_6] : memref<2x8xf32, #tpu.memory_space<vmem>>, vector<1x8xf32>
    %cst_7 = arith.constant -1.000000e+09 : f32
    %22 = vector.broadcast %cst_7 : f32 to vector<1x8xf32>
    %23 = arith.mulf %21, %22 : vector<1x8xf32>
    %24 = vector.extract_strided_slice %17 {offsets = [0, 0], sizes = [8, 8], strides = [1, 1]} : vector<8x32xf32> to vector<8x8xf32>
    %25 = vector.extract_strided_slice %20 {offsets = [0, 0], sizes = [8, 8], strides = [1, 1]} : vector<32x8xf32> to vector<8x8xf32>
    %cst_8 = arith.constant dense<0.000000e+00> : vector<8x8xf32>
    %26 = tpu.matmul %24, %25, %cst_8 {dimension_numbers = #tpu.dot_dimension_numbers<[1], [0], [0], [1], [0, 0, 1, 1], [], []>} : vector<8x8xf32>, vector<8x8xf32>, vector<8x8xf32> -> vector<8x8xf32>
    %27 = vector.broadcast %23 : vector<1x8xf32> to vector<8x8xf32>
    %28 = arith.addf %26, %27 : vector<8x8xf32>
    %cst_9 = arith.constant dense<0xFF800000> : vector<8xf32>
    %29 = vector.multi_reduction <maximumf>, %28, %cst_9 [1] : vector<8x8xf32> to vector<8xf32>
    %30 = vector.shape_cast %29 : vector<8xf32> to vector<8x1xf32>
    %31 = vector.broadcast %30 : vector<8x1xf32> to vector<8x8xf32>
    %32 = arith.subf %28, %31 : vector<8x8xf32>
    %33 = math.exp %32 : vector<8x8xf32>
    %cst_10 = arith.constant dense<0.000000e+00> : vector<8xf32>
    %34 = vector.multi_reduction <add>, %33, %cst_10 [1] : vector<8x8xf32> to vector<8xf32>
    %35 = vector.shape_cast %34 : vector<8xf32> to vector<8x1xf32>
    %36 = tpu.reciprocal %35 {approx = true} : vector<8x1xf32> -> vector<8x1xf32>
    %37 = vector.broadcast %36 : vector<8x1xf32> to vector<8x8xf32>
    %38 = arith.mulf %33, %37 : vector<8x8xf32>
    %39 = vector.extract_strided_slice %18 {offsets = [0, 0], sizes = [8, 8], strides = [1, 1]} : vector<8x32xf32> to vector<8x8xf32>
    %cst_11 = arith.constant dense<0.000000e+00> : vector<8x8xf32>
    %40 = tpu.matmul %38, %39, %cst_11 {dimension_numbers = #tpu.dot_dimension_numbers<[1], [0], [0], [1], [0, 0, 1, 1], [], []>} : vector<8x8xf32>, vector<8x8xf32>, vector<8x8xf32> -> vector<8x8xf32>
    %c0_12 = arith.constant 0 : index
    %c0_13 = arith.constant 0 : index
    %41 = vector.load %arg9[%c0_12, %c0_13] : memref<16x32xf32, #tpu.memory_space<vmem>>, vector<8x8xf32>
    tpu.vector_store %arg9[%c0_12, %c0_13], %40 {strides = array<i32>} : memref<16x32xf32, #tpu.memory_space<vmem>>, vector<8x8xf32>,
    %42 = vector.extract_strided_slice %17 {offsets = [0, 8], sizes = [8, 8], strides = [1, 1]} : vector<8x32xf32> to vector<8x8xf32>
    %43 = vector.extract_strided_slice %20 {offsets = [8, 0], sizes = [8, 8], strides = [1, 1]} : vector<32x8xf32> to vector<8x8xf32>
    %cst_14 = arith.constant dense<0.000000e+00> : vector<8x8xf32>
    %44 = tpu.matmul %42, %43, %cst_14 {dimension_numbers = #tpu.dot_dimension_numbers<[1], [0], [0], [1], [0, 0, 1, 1], [], []>} : vector<8x8xf32>, vector<8x8xf32>, vector<8x8xf32> -> vector<8x8xf32>
    %45 = vector.broadcast %23 : vector<1x8xf32> to vector<8x8xf32>
    %46 = arith.addf %44, %45 : vector<8x8xf32>
    %cst_15 = arith.constant dense<0xFF800000> : vector<8xf32>
    %47 = vector.multi_reduction <maximumf>, %46, %cst_15 [1] : vector<8x8xf32> to vector<8xf32>
    %48 = vector.shape_cast %47 : vector<8xf32> to vector<8x1xf32>
    %49 = vector.broadcast %48 : vector<8x1xf32> to vector<8x8xf32>
    %50 = arith.subf %46, %49 : vector<8x8xf32>
    %51 = math.exp %50 : vector<8x8xf32>
    %cst_16 = arith.constant dense<0.000000e+00> : vector<8xf32>
    %52 = vector.multi_reduction <add>, %51, %cst_16 [1] : vector<8x8xf32> to vector<8xf32>
    %53 = vector.shape_cast %52 : vector<8xf32> to vector<8x1xf32>
    %54 = tpu.reciprocal %53 {approx = true} : vector<8x1xf32> -> vector<8x1xf32>
    %55 = vector.broadcast %54 : vector<8x1xf32> to vector<8x8xf32>
    %56 = arith.mulf %51, %55 : vector<8x8xf32>
    %57 = vector.extract_strided_slice %18 {offsets = [0, 8], sizes = [8, 8], strides = [1, 1]} : vector<8x32xf32> to vector<8x8xf32>
    %cst_17 = arith.constant dense<0.000000e+00> : vector<8x8xf32>
    %58 = tpu.matmul %56, %57, %cst_17 {dimension_numbers = #tpu.dot_dimension_numbers<[1], [0], [0], [1], [0, 0, 1, 1], [], []>} : vector<8x8xf32>, vector<8x8xf32>, vector<8x8xf32> -> vector<8x8xf32>
    %c0_18 = arith.constant 0 : index
    %c8 = arith.constant 8 : index
    %59 = vector.load %arg9[%c0_18, %c8] : memref<16x32xf32, #tpu.memory_space<vmem>>, vector<8x8xf32>
    tpu.vector_store %arg9[%c0_18, %c8], %58 {strides = array<i32>} : memref<16x32xf32, #tpu.memory_space<vmem>>, vector<8x8xf32>,
    %60 = vector.extract_strided_slice %17 {offsets = [0, 16], sizes = [8, 8], strides = [1, 1]} : vector<8x32xf32> to vector<8x8xf32>
    %61 = vector.extract_strided_slice %20 {offsets = [16, 0], sizes = [8, 8], strides = [1, 1]} : vector<32x8xf32> to vector<8x8xf32>
    %cst_19 = arith.constant dense<0.000000e+00> : vector<8x8xf32>
    %62 = tpu.matmul %60, %61, %cst_19 {dimension_numbers = #tpu.dot_dimension_numbers<[1], [0], [0], [1], [0, 0, 1, 1], [], []>} : vector<8x8xf32>, vector<8x8xf32>, vector<8x8xf32> -> vector<8x8xf32>
    %63 = vector.broadcast %23 : vector<1x8xf32> to vector<8x8xf32>
    %64 = arith.addf %62, %63 : vector<8x8xf32>
    %cst_20 = arith.constant dense<0xFF800000> : vector<8xf32>
    %65 = vector.multi_reduction <maximumf>, %64, %cst_20 [1] : vector<8x8xf32> to vector<8xf32>
    %66 = vector.shape_cast %65 : vector<8xf32> to vector<8x1xf32>
    %67 = vector.broadcast %66 : vector<8x1xf32> to vector<8x8xf32>
    %68 = arith.subf %64, %67 : vector<8x8xf32>
    %69 = math.exp %68 : vector<8x8xf32>
    %cst_21 = arith.constant dense<0.000000e+00> : vector<8xf32>
    %70 = vector.multi_reduction <add>, %69, %cst_21 [1] : vector<8x8xf32> to vector<8xf32>
    %71 = vector.shape_cast %70 : vector<8xf32> to vector<8x1xf32>
    %72 = tpu.reciprocal %71 {approx = true} : vector<8x1xf32> -> vector<8x1xf32>
    %73 = vector.broadcast %72 : vector<8x1xf32> to vector<8x8xf32>
    %74 = arith.mulf %69, %73 : vector<8x8xf32>
    %75 = vector.extract_strided_slice %18 {offsets = [0, 16], sizes = [8, 8], strides = [1, 1]} : vector<8x32xf32> to vector<8x8xf32>
    %cst_22 = arith.constant dense<0.000000e+00> : vector<8x8xf32>
    %76 = tpu.matmul %74, %75, %cst_22 {dimension_numbers = #tpu.dot_dimension_numbers<[1], [0], [0], [1], [0, 0, 1, 1], [], []>} : vector<8x8xf32>, vector<8x8xf32>, vector<8x8xf32> -> vector<8x8xf32>
    %c0_23 = arith.constant 0 : index
    %c16 = arith.constant 16 : index
    %77 = vector.load %arg9[%c0_23, %c16] : memref<16x32xf32, #tpu.memory_space<vmem>>, vector<8x8xf32>
    tpu.vector_store %arg9[%c0_23, %c16], %76 {strides = array<i32>} : memref<16x32xf32, #tpu.memory_space<vmem>>, vector<8x8xf32>,
    %78 = vector.extract_strided_slice %17 {offsets = [0, 24], sizes = [8, 8], strides = [1, 1]} : vector<8x32xf32> to vector<8x8xf32>
    %79 = vector.extract_strided_slice %20 {offsets = [24, 0], sizes = [8, 8], strides = [1, 1]} : vector<32x8xf32> to vector<8x8xf32>
    %cst_24 = arith.constant dense<0.000000e+00> : vector<8x8xf32>
    %80 = tpu.matmul %78, %79, %cst_24 {dimension_numbers = #tpu.dot_dimension_numbers<[1], [0], [0], [1], [0, 0, 1, 1], [], []>} : vector<8x8xf32>, vector<8x8xf32>, vector<8x8xf32> -> vector<8x8xf32>
    %81 = vector.broadcast %23 : vector<1x8xf32> to vector<8x8xf32>
    %82 = arith.addf %80, %81 : vector<8x8xf32>
    %cst_25 = arith.constant dense<0xFF800000> : vector<8xf32>
    %83 = vector.multi_reduction <maximumf>, %82, %cst_25 [1] : vector<8x8xf32> to vector<8xf32>
    %84 = vector.shape_cast %83 : vector<8xf32> to vector<8x1xf32>
    %85 = vector.broadcast %84 : vector<8x1xf32> to vector<8x8xf32>
    %86 = arith.subf %82, %85 : vector<8x8xf32>
    %87 = math.exp %86 : vector<8x8xf32>
    %cst_26 = arith.constant dense<0.000000e+00> : vector<8xf32>
    %88 = vector.multi_reduction <add>, %87, %cst_26 [1] : vector<8x8xf32> to vector<8xf32>
    %89 = vector.shape_cast %88 : vector<8xf32> to vector<8x1xf32>
    %90 = tpu.reciprocal %89 {approx = true} : vector<8x1xf32> -> vector<8x1xf32>
    %91 = vector.broadcast %90 : vector<8x1xf32> to vector<8x8xf32>
    %92 = arith.mulf %87, %91 : vector<8x8xf32>
    %93 = vector.extract_strided_slice %18 {offsets = [0, 24], sizes = [8, 8], strides = [1, 1]} : vector<8x32xf32> to vector<8x8xf32>
    %cst_27 = arith.constant dense<0.000000e+00> : vector<8x8xf32>
    %94 = tpu.matmul %92, %93, %cst_27 {dimension_numbers = #tpu.dot_dimension_numbers<[1], [0], [0], [1], [0, 0, 1, 1], [], []>} : vector<8x8xf32>, vector<8x8xf32>, vector<8x8xf32> -> vector<8x8xf32>
    %c0_28 = arith.constant 0 : index
    %c24 = arith.constant 24 : index
    %95 = vector.load %arg9[%c0_28, %c24] : memref<16x32xf32, #tpu.memory_space<vmem>>, vector<8x8xf32>
    tpu.vector_store %arg9[%c0_28, %c24], %94 {strides = array<i32>} : memref<16x32xf32, #tpu.memory_space<vmem>>, vector<8x8xf32>,
    %96 = vector.extract_strided_slice %14 {offsets = [8, 0], sizes = [8, 32], strides = [1, 1]} : vector<16x32xf32> to vector<8x32xf32>
    %97 = vector.extract_strided_slice %16 {offsets = [8, 0], sizes = [8, 32], strides = [1, 1]} : vector<16x32xf32> to vector<8x32xf32>
    %98 = vector.extract_strided_slice %15 {offsets = [8, 0], sizes = [8, 32], strides = [1, 1]} : vector<16x32xf32> to vector<8x32xf32>
    %99 = tpu.transpose %98, [1, 0] : vector<8x32xf32> -> vector<32x8xf32>
    %c1 = arith.constant 1 : index
    %c0_29 = arith.constant 0 : index
    %100 = vector.load %arg2[%c1, %c0_29] : memref<2x8xf32, #tpu.memory_space<vmem>>, vector<1x8xf32>
    %cst_30 = arith.constant -1.000000e+09 : f32
    %101 = vector.broadcast %cst_30 : f32 to vector<1x8xf32>
    %102 = arith.mulf %100, %101 : vector<1x8xf32>
    %103 = vector.extract_strided_slice %96 {offsets = [0, 0], sizes = [8, 8], strides = [1, 1]} : vector<8x32xf32> to vector<8x8xf32>
    %104 = vector.extract_strided_slice %99 {offsets = [0, 0], sizes = [8, 8], strides = [1, 1]} : vector<32x8xf32> to vector<8x8xf32>
    %cst_31 = arith.constant dense<0.000000e+00> : vector<8x8xf32>
    %105 = tpu.matmul %103, %104, %cst_31 {dimension_numbers = #tpu.dot_dimension_numbers<[1], [0], [0], [1], [0, 0, 1, 1], [], []>} : vector<8x8xf32>, vector<8x8xf32>, vector<8x8xf32> -> vector<8x8xf32>
    %106 = vector.broadcast %102 : vector<1x8xf32> to vector<8x8xf32>
    %107 = arith.addf %105, %106 : vector<8x8xf32>
    %cst_32 = arith.constant dense<0xFF800000> : vector<8xf32>
    %108 = vector.multi_reduction <maximumf>, %107, %cst_32 [1] : vector<8x8xf32> to vector<8xf32>
    %109 = vector.shape_cast %108 : vector<8xf32> to vector<8x1xf32>
    %110 = vector.broadcast %109 : vector<8x1xf32> to vector<8x8xf32>
    %111 = arith.subf %107, %110 : vector<8x8xf32>
    %112 = math.exp %111 : vector<8x8xf32>
    %cst_33 = arith.constant dense<0.000000e+00> : vector<8xf32>
    %113 = vector.multi_reduction <add>, %112, %cst_33 [1] : vector<8x8xf32> to vector<8xf32>
    %114 = vector.shape_cast %113 : vector<8xf32> to vector<8x1xf32>
    %115 = tpu.reciprocal %114 {approx = true} : vector<8x1xf32> -> vector<8x1xf32>
    %116 = vector.broadcast %115 : vector<8x1xf32> to vector<8x8xf32>
    %117 = arith.mulf %112, %116 : vector<8x8xf32>
    %118 = vector.extract_strided_slice %97 {offsets = [0, 0], sizes = [8, 8], strides = [1, 1]} : vector<8x32xf32> to vector<8x8xf32>
    %cst_34 = arith.constant dense<0.000000e+00> : vector<8x8xf32>
    %119 = tpu.matmul %117, %118, %cst_34 {dimension_numbers = #tpu.dot_dimension_numbers<[1], [0], [0], [1], [0, 0, 1, 1], [], []>} : vector<8x8xf32>, vector<8x8xf32>, vector<8x8xf32> -> vector<8x8xf32>
    %c8_35 = arith.constant 8 : index
    %c0_36 = arith.constant 0 : index
    %120 = vector.load %arg9[%c8_35, %c0_36] : memref<16x32xf32, #tpu.memory_space<vmem>>, vector<8x8xf32>
    tpu.vector_store %arg9[%c8_35, %c0_36], %119 {strides = array<i32>} : memref<16x32xf32, #tpu.memory_space<vmem>>, vector<8x8xf32>,
    %121 = vector.extract_strided_slice %96 {offsets = [0, 8], sizes = [8, 8], strides = [1, 1]} : vector<8x32xf32> to vector<8x8xf32>
    %122 = vector.extract_strided_slice %99 {offsets = [8, 0], sizes = [8, 8], strides = [1, 1]} : vector<32x8xf32> to vector<8x8xf32>
    %cst_37 = arith.constant dense<0.000000e+00> : vector<8x8xf32>
    %123 = tpu.matmul %121, %122, %cst_37 {dimension_numbers = #tpu.dot_dimension_numbers<[1], [0], [0], [1], [0, 0, 1, 1], [], []>} : vector<8x8xf32>, vector<8x8xf32>, vector<8x8xf32> -> vector<8x8xf32>
    %124 = vector.broadcast %102 : vector<1x8xf32> to vector<8x8xf32>
    %125 = arith.addf %123, %124 : vector<8x8xf32>
    %cst_38 = arith.constant dense<0xFF800000> : vector<8xf32>
    %126 = vector.multi_reduction <maximumf>, %125, %cst_38 [1] : vector<8x8xf32> to vector<8xf32>
    %127 = vector.shape_cast %126 : vector<8xf32> to vector<8x1xf32>
    %128 = vector.broadcast %127 : vector<8x1xf32> to vector<8x8xf32>
    %129 = arith.subf %125, %128 : vector<8x8xf32>
    %130 = math.exp %129 : vector<8x8xf32>
    %cst_39 = arith.constant dense<0.000000e+00> : vector<8xf32>
    %131 = vector.multi_reduction <add>, %130, %cst_39 [1] : vector<8x8xf32> to vector<8xf32>
    %132 = vector.shape_cast %131 : vector<8xf32> to vector<8x1xf32>
    %133 = tpu.reciprocal %132 {approx = true} : vector<8x1xf32> -> vector<8x1xf32>
    %134 = vector.broadcast %133 : vector<8x1xf32> to vector<8x8xf32>
    %135 = arith.mulf %130, %134 : vector<8x8xf32>
    %136 = vector.extract_strided_slice %97 {offsets = [0, 8], sizes = [8, 8], strides = [1, 1]} : vector<8x32xf32> to vector<8x8xf32>
    %cst_40 = arith.constant dense<0.000000e+00> : vector<8x8xf32>
    %137 = tpu.matmul %135, %136, %cst_40 {dimension_numbers = #tpu.dot_dimension_numbers<[1], [0], [0], [1], [0, 0, 1, 1], [], []>} : vector<8x8xf32>, vector<8x8xf32>, vector<8x8xf32> -> vector<8x8xf32>
    %c8_41 = arith.constant 8 : index
    %c8_42 = arith.constant 8 : index
    %138 = vector.load %arg9[%c8_41, %c8_42] : memref<16x32xf32, #tpu.memory_space<vmem>>, vector<8x8xf32>
    tpu.vector_store %arg9[%c8_41, %c8_42], %137 {strides = array<i32>} : memref<16x32xf32, #tpu.memory_space<vmem>>, vector<8x8xf32>,
    %139 = vector.extract_strided_slice %96 {offsets = [0, 16], sizes = [8, 8], strides = [1, 1]} : vector<8x32xf32> to vector<8x8xf32>
    %140 = vector.extract_strided_slice %99 {offsets = [16, 0], sizes = [8, 8], strides = [1, 1]} : vector<32x8xf32> to vector<8x8xf32>
    %cst_43 = arith.constant dense<0.000000e+00> : vector<8x8xf32>
    %141 = tpu.matmul %139, %140, %cst_43 {dimension_numbers = #tpu.dot_dimension_numbers<[1], [0], [0], [1], [0, 0, 1, 1], [], []>} : vector<8x8xf32>, vector<8x8xf32>, vector<8x8xf32> -> vector<8x8xf32>
    %142 = vector.broadcast %102 : vector<1x8xf32> to vector<8x8xf32>
    %143 = arith.addf %141, %142 : vector<8x8xf32>
    %cst_44 = arith.constant dense<0xFF800000> : vector<8xf32>
    %144 = vector.multi_reduction <maximumf>, %143, %cst_44 [1] : vector<8x8xf32> to vector<8xf32>
    %145 = vector.shape_cast %144 : vector<8xf32> to vector<8x1xf32>
    %146 = vector.broadcast %145 : vector<8x1xf32> to vector<8x8xf32>
    %147 = arith.subf %143, %146 : vector<8x8xf32>
    %148 = math.exp %147 : vector<8x8xf32>
    %cst_45 = arith.constant dense<0.000000e+00> : vector<8xf32>
    %149 = vector.multi_reduction <add>, %148, %cst_45 [1] : vector<8x8xf32> to vector<8xf32>
    %150 = vector.shape_cast %149 : vector<8xf32> to vector<8x1xf32>
    %151 = tpu.reciprocal %150 {approx = true} : vector<8x1xf32> -> vector<8x1xf32>
    %152 = vector.broadcast %151 : vector<8x1xf32> to vector<8x8xf32>
    %153 = arith.mulf %148, %152 : vector<8x8xf32>
    %154 = vector.extract_strided_slice %97 {offsets = [0, 16], sizes = [8, 8], strides = [1, 1]} : vector<8x32xf32> to vector<8x8xf32>
    %cst_46 = arith.constant dense<0.000000e+00> : vector<8x8xf32>
    %155 = tpu.matmul %153, %154, %cst_46 {dimension_numbers = #tpu.dot_dimension_numbers<[1], [0], [0], [1], [0, 0, 1, 1], [], []>} : vector<8x8xf32>, vector<8x8xf32>, vector<8x8xf32> -> vector<8x8xf32>
    %c8_47 = arith.constant 8 : index
    %c16_48 = arith.constant 16 : index
    %156 = vector.load %arg9[%c8_47, %c16_48] : memref<16x32xf32, #tpu.memory_space<vmem>>, vector<8x8xf32>
    tpu.vector_store %arg9[%c8_47, %c16_48], %155 {strides = array<i32>} : memref<16x32xf32, #tpu.memory_space<vmem>>, vector<8x8xf32>,
    %157 = vector.extract_strided_slice %96 {offsets = [0, 24], sizes = [8, 8], strides = [1, 1]} : vector<8x32xf32> to vector<8x8xf32>
    %158 = vector.extract_strided_slice %99 {offsets = [24, 0], sizes = [8, 8], strides = [1, 1]} : vector<32x8xf32> to vector<8x8xf32>
    %cst_49 = arith.constant dense<0.000000e+00> : vector<8x8xf32>
    %159 = tpu.matmul %157, %158, %cst_49 {dimension_numbers = #tpu.dot_dimension_numbers<[1], [0], [0], [1], [0, 0, 1, 1], [], []>} : vector<8x8xf32>, vector<8x8xf32>, vector<8x8xf32> -> vector<8x8xf32>
    %160 = vector.broadcast %102 : vector<1x8xf32> to vector<8x8xf32>
    %161 = arith.addf %159, %160 : vector<8x8xf32>
    %cst_50 = arith.constant dense<0xFF800000> : vector<8xf32>
    %162 = vector.multi_reduction <maximumf>, %161, %cst_50 [1] : vector<8x8xf32> to vector<8xf32>
    %163 = vector.shape_cast %162 : vector<8xf32> to vector<8x1xf32>
    %164 = vector.broadcast %163 : vector<8x1xf32> to vector<8x8xf32>
    %165 = arith.subf %161, %164 : vector<8x8xf32>
    %166 = math.exp %165 : vector<8x8xf32>
    %cst_51 = arith.constant dense<0.000000e+00> : vector<8xf32>
    %167 = vector.multi_reduction <add>, %166, %cst_51 [1] : vector<8x8xf32> to vector<8xf32>
    %168 = vector.shape_cast %167 : vector<8xf32> to vector<8x1xf32>
    %169 = tpu.reciprocal %168 {approx = true} : vector<8x1xf32> -> vector<8x1xf32>
    %170 = vector.broadcast %169 : vector<8x1xf32> to vector<8x8xf32>
    %171 = arith.mulf %166, %170 : vector<8x8xf32>
    %172 = vector.extract_strided_slice %97 {offsets = [0, 24], sizes = [8, 8], strides = [1, 1]} : vector<8x32xf32> to vector<8x8xf32>
    %cst_52 = arith.constant dense<0.000000e+00> : vector<8x8xf32>
    %173 = tpu.matmul %171, %172, %cst_52 {dimension_numbers = #tpu.dot_dimension_numbers<[1], [0], [0], [1], [0, 0, 1, 1], [], []>} : vector<8x8xf32>, vector<8x8xf32>, vector<8x8xf32> -> vector<8x8xf32>
    %c8_53 = arith.constant 8 : index
    %c24_54 = arith.constant 24 : index
    %174 = vector.load %arg9[%c8_53, %c24_54] : memref<16x32xf32, #tpu.memory_space<vmem>>, vector<8x8xf32>
    tpu.vector_store %arg9[%c8_53, %c24_54], %173 {strides = array<i32>} : memref<16x32xf32, #tpu.memory_space<vmem>>, vector<8x8xf32>,
    %c0_55 = arith.constant 0 : index
    %c0_56 = arith.constant 0 : index
    %175 = vector.load %arg9[%c0_55, %c0_56] : memref<16x32xf32, #tpu.memory_space<vmem>>, vector<16x32xf32>
    %c0_57 = arith.constant 0 : index
    %c0_58 = arith.constant 0 : index
    %176 = vector.load %arg4[%c0_57, %c0_58] : memref<32x32xf32, #tpu.memory_space<vmem>>, vector<32x32xf32>
    %cst_59 = arith.constant dense<0.000000e+00> : vector<16x32xf32>
    %177 = tpu.matmul %175, %176, %cst_59 {dimension_numbers = #tpu.dot_dimension_numbers<[1], [0], [0], [1], [0, 0, 1, 1], [], []>} : vector<16x32xf32>, vector<32x32xf32>, vector<16x32xf32> -> vector<16x32xf32>
    %178 = vector.broadcast %3 : vector<1x32xf32> to vector<16x32xf32>
    %179 = arith.addf %177, %178 : vector<16x32xf32>
    %180 = arith.addf %0, %179 : vector<16x32xf32>
    %cst_60 = arith.constant dense<0.000000e+00> : vector<16xf32>
    %181 = vector.multi_reduction <add>, %180, %cst_60 [1] : vector<16x32xf32> to vector<16xf32>
    %182 = vector.shape_cast %181 : vector<16xf32> to vector<16x1xf32>
    %cst_61 = arith.constant 3.200000e+01 : f32
    %183 = vector.broadcast %cst_61 : f32 to vector<16x1xf32>
    %184 = arith.divf %182, %183 : vector<16x1xf32>
    %185 = vector.broadcast %184 : vector<16x1xf32> to vector<16x32xf32>
    %186 = arith.subf %180, %185 : vector<16x32xf32>
    %187 = arith.mulf %186, %186 : vector<16x32xf32>
    %cst_62 = arith.constant dense<0.000000e+00> : vector<16xf32>
    %188 = vector.multi_reduction <add>, %187, %cst_62 [1] : vector<16x32xf32> to vector<16xf32>
    %189 = vector.shape_cast %188 : vector<16xf32> to vector<16x1xf32>
    %cst_63 = arith.constant 3.200000e+01 : f32
    %190 = vector.broadcast %cst_63 : f32 to vector<16x1xf32>
    %191 = arith.divf %189, %190 : vector<16x1xf32>
    %192 = vector.broadcast %184 : vector<16x1xf32> to vector<16x32xf32>
    %193 = arith.subf %180, %192 : vector<16x32xf32>
    %cst_64 = arith.constant 9.99999974E-6 : f32
    %194 = vector.broadcast %cst_64 : f32 to vector<16x1xf32>
    %195 = arith.addf %191, %194 : vector<16x1xf32>
    %196 = math.rsqrt %195 : vector<16x1xf32>
    %197 = vector.broadcast %196 : vector<16x1xf32> to vector<16x32xf32>
    %198 = arith.mulf %193, %197 : vector<16x32xf32>
    %199 = vector.broadcast %6 : vector<1x32xf32> to vector<16x32xf32>
    %200 = arith.mulf %198, %199 : vector<16x32xf32>
    %201 = vector.broadcast %7 : vector<1x32xf32> to vector<16x32xf32>
    %202 = arith.addf %200, %201 : vector<16x32xf32>
    %c0_65 = arith.constant 0 : index
    %c0_66 = arith.constant 0 : index
    %203 = vector.load %arg5[%c0_65, %c0_66] : memref<32x64xf32, #tpu.memory_space<vmem>>, vector<32x64xf32>
    %cst_67 = arith.constant dense<0.000000e+00> : vector<16x64xf32>
    %204 = tpu.matmul %202, %203, %cst_67 {dimension_numbers = #tpu.dot_dimension_numbers<[1], [0], [0], [1], [0, 0, 1, 1], [], []>} : vector<16x32xf32>, vector<32x64xf32>, vector<16x64xf32> -> vector<16x64xf32>
    %205 = vector.broadcast %4 : vector<1x64xf32> to vector<16x64xf32>
    %206 = arith.addf %204, %205 : vector<16x64xf32>
    %cst_68 = arith.constant 0.000000e+00 : f32
    %207 = vector.broadcast %cst_68 : f32 to vector<16x64xf32>
    %208 = arith.maximumf %206, %207 : vector<16x64xf32>
    %c0_69 = arith.constant 0 : index
    %c0_70 = arith.constant 0 : index
    %209 = vector.load %arg6[%c0_69, %c0_70] : memref<64x32xf32, #tpu.memory_space<vmem>>, vector<64x32xf32>
    %cst_71 = arith.constant dense<0.000000e+00> : vector<16x32xf32>
    %210 = tpu.matmul %208, %209, %cst_71 {dimension_numbers = #tpu.dot_dimension_numbers<[1], [0], [0], [1], [0, 0, 1, 1], [], []>} : vector<16x64xf32>, vector<64x32xf32>, vector<16x32xf32> -> vector<16x32xf32>
    %211 = vector.broadcast %5 : vector<1x32xf32> to vector<16x32xf32>
    %212 = arith.addf %210, %211 : vector<16x32xf32>
    %213 = arith.addf %202, %212 : vector<16x32xf32>
    %cst_72 = arith.constant dense<0.000000e+00> : vector<16xf32>
    %214 = vector.multi_reduction <add>, %213, %cst_72 [1] : vector<16x32xf32> to vector<16xf32>
    %215 = vector.shape_cast %214 : vector<16xf32> to vector<16x1xf32>
    %cst_73 = arith.constant 3.200000e+01 : f32
    %216 = vector.broadcast %cst_73 : f32 to vector<16x1xf32>
    %217 = arith.divf %215, %216 : vector<16x1xf32>
    %218 = vector.broadcast %217 : vector<16x1xf32> to vector<16x32xf32>
    %219 = arith.subf %213, %218 : vector<16x32xf32>
    %220 = arith.mulf %219, %219 : vector<16x32xf32>
    %cst_74 = arith.constant dense<0.000000e+00> : vector<16xf32>
    %221 = vector.multi_reduction <add>, %220, %cst_74 [1] : vector<16x32xf32> to vector<16xf32>
    %222 = vector.shape_cast %221 : vector<16xf32> to vector<16x1xf32>
    %cst_75 = arith.constant 3.200000e+01 : f32
    %223 = vector.broadcast %cst_75 : f32 to vector<16x1xf32>
    %224 = arith.divf %222, %223 : vector<16x1xf32>
    %225 = vector.broadcast %217 : vector<16x1xf32> to vector<16x32xf32>
    %226 = arith.subf %213, %225 : vector<16x32xf32>
    %cst_76 = arith.constant 9.99999974E-6 : f32
    %227 = vector.broadcast %cst_76 : f32 to vector<16x1xf32>
    %228 = arith.addf %224, %227 : vector<16x1xf32>
    %229 = math.rsqrt %228 : vector<16x1xf32>
    %230 = vector.broadcast %229 : vector<16x1xf32> to vector<16x32xf32>
    %231 = arith.mulf %226, %230 : vector<16x32xf32>
    %232 = vector.broadcast %8 : vector<1x32xf32> to vector<16x32xf32>
    %233 = arith.mulf %231, %232 : vector<16x32xf32>
    %234 = vector.broadcast %9 : vector<1x32xf32> to vector<16x32xf32>
    %235 = arith.addf %233, %234 : vector<16x32xf32>
    %c0_77 = arith.constant 0 : index
    %c0_78 = arith.constant 0 : index
    %236 = vector.load %arg8[%c0_77, %c0_78] : memref<16x32xf32, #tpu.memory_space<vmem>>, vector<16x32xf32>
    tpu.vector_store %arg8[%c0_77, %c0_78], %235 {strides = array<i32>} : memref<16x32xf32, #tpu.memory_space<vmem>>, vector<16x32xf32>,
    return
  }
  func.func @transform_0(%arg0: i32) -> (i32, i32) {
    %c0_i32 = arith.constant 0 : i32
    %c0_i32_0 = arith.constant 0 : i32
    %c0_i32_1 = arith.constant 0 : i32
    return %c0_i32, %c0_i32_0 : i32, i32
  }
  func.func @transform_1(%arg0: i32) -> (i32, i32) {
    %c0_i32 = arith.constant 0 : i32
    %c0_i32_0 = arith.constant 0 : i32
    %c0_i32_1 = arith.constant 0 : i32
    return %c0_i32, %c0_i32_0 : i32, i32
  }
  func.func @transform_2(%arg0: i32) -> (i32, i32) {
    %c0_i32 = arith.constant 0 : i32
    %c0_i32_0 = arith.constant 0 : i32
    %c0_i32_1 = arith.constant 0 : i32
    return %c0_i32, %c0_i32_0 : i32, i32
  }
  func.func @transform_3(%arg0: i32) -> (i32, i32) {
    %c0_i32 = arith.constant 0 : i32
    %c0_i32_0 = arith.constant 0 : i32
    %c0_i32_1 = arith.constant 0 : i32
    return %c0_i32, %c0_i32_0 : i32, i32
  }
  func.func @transform_4(%arg0: i32) -> (i32, i32) {
    %c0_i32 = arith.constant 0 : i32
    %c0_i32_0 = arith.constant 0 : i32
    %c0_i32_1 = arith.constant 0 : i32
    return %c0_i32, %c0_i32_0 : i32, i32
  }
  func.func @transform_5(%arg0: i32) -> (i32, i32) {
    %c0_i32 = arith.constant 0 : i32
    %c0_i32_0 = arith.constant 0 : i32
    %c0_i32_1 = arith.constant 0 : i32
    return %c0_i32, %c0_i32_0 : i32, i32
  }
  func.func @transform_6(%arg0: i32) -> (i32, i32) {
    %c0_i32 = arith.constant 0 : i32
    %c0_i32_0 = arith.constant 0 : i32
    %c0_i32_1 = arith.constant 0 : i32
    return %c0_i32, %c0_i32_0 : i32, i32
  }
  func.func @transform_7(%arg0: i32) -> (i32, i32) {
    %c0_i32 = arith.constant 0 : i32
    %c0_i32_0 = arith.constant 0 : i32
    %c0_i32_1 = arith.constant 0 : i32
    return %c0_i32, %c0_i32_0 : i32, i32
  }
}

</mosaic_0001>

<llo_original>
// kernel: tpu_custom_call.1
$region0: #{tpu_custom_call.1}
  #allocation0 [shape = 'u32[]', space=smem, size = 0x4, offset = 0x4, fixed_abs, tag = 'smem constant byte address 0x4 - core index']
  #allocation1 [shape = 'u32[144,128]{1,0:T(1,128)}', space=vmem, size = 0x12000, scoped, tag = 'internal scratch']
  #allocation2 [shape = 'f32[16,32]{1,0:T(8,128)}', space=vmem, size = 0x2000, scoped, tag = 'scratch operand']
  %s0 = inlined_call_operand.hbm [shape: f32[16,32], index: 0, kind: input, shape index: {}]
  %s1 = inlined_call_operand.vmem [shape: f32[2,8], index: 1, kind: input, shape index: {}]
  %s2 = inlined_call_operand.vmem [shape: f32[32,96], index: 2, kind: input, shape index: {}]
  %s3 = inlined_call_operand.vmem [shape: f32[32,32], index: 3, kind: input, shape index: {}]
  %s4 = inlined_call_operand.vmem [shape: f32[32,64], index: 4, kind: input, shape index: {}]
  %s5 = inlined_call_operand.vmem [shape: f32[64,32], index: 5, kind: input, shape index: {}]
  %s6 = inlined_call_operand.vmem [shape: f32[8,128], index: 6, kind: input, shape index: {}]
  %s7 = inlined_call_operand.hbm [shape: f32[16,32], index: 7, kind: output, shape index: {}]
  %s8 = sld [smem:[#allocation0]]
  $region42: #{tpu_custom_call.1} parent=0
    _
  %s10 = ssub.s32 1, %s8
  %s11 = scalar_select 0, %s10, %s8
  $region1: #{tpu_custom_call.1} parent=0
    #allocation3 [shape = 'u8[8192]{0}', space=vmem, size = 0x2000, scoped, tag = 'input window, operand 0, single buffered']
    #allocation4 [shape = 's32[1]{0}', space=sflag, size = 0x4, scoped, tag = 'scoped memory for tpu_custom_call.1']
    #allocation5 [shape = 's32[1]{0}', space=sflag, size = 0x4, scoped, tag = 'scoped memory for tpu_custom_call.1']
    #allocation6 [shape = 'u8[8192]{0}', space=vmem, size = 0x2000, scoped, tag = 'output window, operand 0, single buffered']
    %12 = vsyncpa [#allocation4], 0
    %13 = vsyncpa [#allocation5], 0
    // Predicated region
    $region2: #{tpu_custom_call.1} parent=1 // pred_check
      _
    $region3: #{tpu_custom_call.1} parent=1 // pred_check_branch
      %15 = sbr.rel (0) target = $region5
    $region4: #{tpu_custom_call.1} parent=1 // pred_region
      %s17 = ssub.s32 256, 256
      %18 = vsyncadd [#allocation4], %s17
      %s19 = sshll.u32 [#allocation3], 4
      %s20 = int_to_ptr.vmem [resolvable:$true] %s19
      %25 = dma.hbm_to_vmem [thread:$0]  %s0, 256, %s20, [#allocation4], 128, 128, 8
    $region5: #{tpu_custom_call.1} parent=1 // pred_fallthru
      _
    // Predicated region
    $region6: #{tpu_custom_call.1} parent=1 // pred_check
      _
    $region7: #{tpu_custom_call.1} parent=1 // pred_check_branch
      %27 = sbr.rel (0) target = $region9
    $region8: #{tpu_custom_call.1} parent=1 // pred_region
      _
    $region9: #{tpu_custom_call.1} parent=1 // pred_fallthru
      _
    // Predicated region
    $region10: #{tpu_custom_call.1} parent=1 // pred_check
      _
    $region11: #{tpu_custom_call.1} parent=1 // pred_check_branch
      %29 = sbr.rel (0) target = $region13
    $region12: #{tpu_custom_call.1} parent=1 // pred_region
      _
    $region13: #{tpu_custom_call.1} parent=1 // pred_fallthru
      _
    // Predicated region
    $region14: #{tpu_custom_call.1} parent=1 // pred_check
      _
    $region15: #{tpu_custom_call.1} parent=1 // pred_check_branch
      %31 = sbr.rel (0) target = $region17
    $region16: #{tpu_custom_call.1} parent=1 // pred_region
      _
    $region17: #{tpu_custom_call.1} parent=1 // pred_fallthru
      _
    // Predicated region
    $region18: #{tpu_custom_call.1} parent=1 // pred_check
      _
    $region19: #{tpu_custom_call.1} parent=1 // pred_check_branch
      %33 = sbr.rel (0) target = $region21
    $region20: #{tpu_custom_call.1} parent=1 // pred_region
      _
    $region21: #{tpu_custom_call.1} parent=1 // pred_fallthru
      _
    // Predicated region
    $region22: #{tpu_custom_call.1} parent=1 // pred_check
      _
    $region23: #{tpu_custom_call.1} parent=1 // pred_check_branch
      %35 = sbr.rel (0) target = $region25
    $region24: #{tpu_custom_call.1} parent=1 // pred_region
      _
    $region25: #{tpu_custom_call.1} parent=1 // pred_fallthru
      _
    // Predicated region
    $region26: #{tpu_custom_call.1} parent=1 // pred_check
      _
    $region27: #{tpu_custom_call.1} parent=1 // pred_check_branch
      %37 = sbr.rel (0) target = $region29
    $region28: #{tpu_custom_call.1} parent=1 // pred_region
      _
    $region29: #{tpu_custom_call.1} parent=1 // pred_fallthru
      _
    // Predicated region
    $region30: #{tpu_custom_call.1} parent=1 // pred_check
      _
    $region31: #{tpu_custom_call.1} parent=1 // pred_check_branch
      %39 = sbr.rel (0) target = $region33
    $region32: #{tpu_custom_call.1} parent=1 // pred_region
      %40 = dma.done [#allocation4], 256
    $region33: #{tpu_custom_call.1} parent=1 // pred_fallthru
      _
    %v41 = vld [vmem:[#allocation3] sm:$0xff]
    %v42 = vld [vmem:[#allocation3 + $0x8] sm:$0xff]
    %v43 = vld [vmem:[%s6] sm:$0xff]
    %v44 = vld [vmem:[%s2] sm:$0xff]
    %v45 = vld [vmem:[%s2 + $0x8] sm:$0xff]
    %v46 = vld [vmem:[%s2 + $0x10] sm:$0xff]
    %v47 = vld [vmem:[%s2 + $0x18] sm:$0xff]
    %v48 = vlaneseq
    %v49 = vshrl.u32 %v48, 7
    %v50 = vsub.s32 0, %v49
    %v51 = vrot.slane %v43, %v50
    %vm52 = vcmask 261120
    %v54 = vsel %vm52, %v41, 0
    %v57 = vsel %vm52, %v42, 0
    %59 = vmatprep.subr.mxu0 0.0
    %60 = vmatpush1.msra.mxu0 %v44
    %61 = vmatprep.subr.mxu0 0.0
    %62 = vmatpush1.msra.mxu0 %v45
    %63 = vmatprep.subr.mxu0 0.0
    %64 = vmatpush1.msra.mxu0 %v46
    %65 = vmatprep.subr.mxu0 0.0
    %66 = vmatpush1.msra.mxu0 %v47
    %67 = vmatprep.subr.mxu0 0.0
    %68 = vmatpush1.msra.mxu0 0.0
    %69 = vmatprep.subr.mxu0 0.0
    %70 = vmatpush1.msra.mxu0 0.0
    %71 = vmatprep.subr.mxu0 0.0
    %72 = vmatpush1.msra.mxu0 0.0
    %73 = vmatprep.subr.mxu0 0.0
    %74 = vmatpush1.msra.mxu0 0.0
    %75 = vmatprep.subr.mxu0 0.0
    %76 = vmatpush1.msra.mxu0 0.0
    %77 = vmatprep.subr.mxu0 0.0
    %78 = vmatpush1.msra.mxu0 0.0
    %79 = vmatprep.subr.mxu0 0.0
    %80 = vmatpush1.msra.mxu0 0.0
    %81 = vmatprep.subr.mxu0 0.0
    %82 = vmatpush1.msra.mxu0 0.0
    %83 = vmatprep.subr.mxu0 0.0
    %84 = vmatpush1.msra.mxu0 0.0
    %85 = vmatprep.subr.mxu0 0.0
    %86 = vmatpush1.msra.mxu0 0.0
    %87 = vmatprep.subr.mxu0 0.0
    %88 = vmatpush1.msra.mxu0 0.0
    %89 = vmatprep.subr.mxu0 0.0
    %90 = vmatpush1.msra.mxu0 0.0
    %91 = vmatprep.subr.mxu0 0.0
    %92 = vmatpush1.msra.mxu0 0.0
    %93 = vmatprep.subr.mxu0 0.0
    %94 = vmatpush1.msra.mxu0 0.0
    %95 = vmatprep.subr.mxu0 0.0
    %96 = vmatpush1.msra.mxu0 0.0
    %97 = vmatprep.subr.mxu0 0.0
    %98 = vmatpush1.msra.mxu0 0.0
    %99 = vmatprep.subr.mxu0 0.0
    %100 = vmatpush1.msra.mxu0 0.0
    %101 = vmatprep.subr.mxu0 0.0
    %102 = vmatpush1.msra.mxu0 0.0
    %103 = vmatprep.subr.mxu0 0.0
    %104 = vmatpush1.msra.mxu0 0.0
    %105 = vmatprep.subr.mxu0 0.0
    %106 = vmatpush1.msra.mxu0 0.0
    %107 = vmatprep.subr.mxu0 0.0
    %108 = vmatpush1.msra.mxu0 0.0
    %109 = vmatprep.subr.mxu0 0.0
    %110 = vmatpush1.msra.mxu0 0.0
    %111 = vmatprep.subr.mxu0 0.0
    %112 = vmatpush1.msra.mxu0 0.0
    %113 = vmatprep.subr.mxu0 0.0
    %114 = vmatpush1.msra.mxu0 0.0
    %115 = vmatprep.subr.mxu0 0.0
    %116 = vmatpush1.msra.mxu0 0.0
    %117 = vmatprep.subr.mxu0 0.0
    %118 = vmatpush1.msra.mxu0 0.0
    %119 = vmatprep.subr.mxu0 0.0
    %120 = vmatpush1.msra.mxu0 0.0
    %121 = vmatprep.subr.mxu0 0.0
    %122 = vmatpush1.msra.mxu0 0.0
    %123 = vmatprep.mubr.f32.mxu0 0.0
    %124 = vmatmul.mubr.f32.gmra.mrb[0].mxu0 %v54
    %v125 = vpop.f32.mrb[0].mxu0
    %v126 = vadd.f32 %v51, %v125
    %v127 = vpop.f32.mrb[0].mxu0
    %128 = vmatprep.mubr.f32.mxu0 0.0
    %129 = vmatmul.mubr.f32.gmra.mrb[0].mxu0 %v57
    %v130 = vpop.f32.mrb[0].mxu0
    %v131 = vadd.f32 %v51, %v130
    %v132 = vpop.f32.mrb[0].mxu0
    %133 = vdwg.mxu0
    %v134 = vld [vmem:[%s1] sm:$0x1]
    %v135 = vmul.f32 %v134, -1e+09
    %v136 = vlaneseq
    %v137 = vshrl.u32 %v136, 7
    %v138 = vsub.s32 0, %v137
    %v139 = vrot.slane %v135, %v138
    %141 = vrot.lane.b32.xlu0 %v126, 96
    %v142 = vpop.permute.xlu0 %141
    %vm143 = vcmask 64512
    %v144 = vsel %vm143, %v126, 0
    %v146 = vsel %vm143, %v142, 0
    %148 = vmatprep.subr.mxu0 0.0
    %149 = vmatpush1.xpose.msra.mxu0 %v146
    %150 = vmatprep.subr.mxu0 0.0
    %151 = vmatpush1.xpose.msra.mxu0 0.0
    %152 = vmatprep.subr.mxu0 0.0
    %153 = vmatpush1.xpose.msra.mxu0 0.0
    %154 = vmatprep.subr.mxu0 0.0
    %155 = vmatpush1.xpose.msra.mxu0 0.0
    %156 = vmatprep.subr.mxu0 0.0
    %157 = vmatpush1.xpose.msra.mxu0 0.0
    %158 = vmatprep.subr.mxu0 0.0
    %159 = vmatpush1.xpose.msra.mxu0 0.0
    %160 = vmatprep.subr.mxu0 0.0
    %161 = vmatpush1.xpose.msra.mxu0 0.0
    %162 = vmatprep.subr.mxu0 0.0
    %163 = vmatpush1.xpose.msra.mxu0 0.0
    %164 = vmatprep.subr.mxu0 0.0
    %165 = vmatpush1.xpose.msra.mxu0 0.0
    %166 = vmatprep.subr.mxu0 0.0
    %167 = vmatpush1.xpose.msra.mxu0 0.0
    %168 = vmatprep.subr.mxu0 0.0
    %169 = vmatpush1.xpose.msra.mxu0 0.0
    %170 = vmatprep.subr.mxu0 0.0
    %171 = vmatpush1.xpose.msra.mxu0 0.0
    %172 = vmatprep.subr.mxu0 0.0
    %173 = vmatpush1.xpose.msra.mxu0 0.0
    %174 = vmatprep.subr.mxu0 0.0
    %175 = vmatpush1.xpose.msra.mxu0 0.0
    %176 = vmatprep.subr.mxu0 0.0
    %177 = vmatpush1.xpose.msra.mxu0 0.0
    %178 = vmatprep.subr.mxu0 0.0
    %179 = vmatpush1.xpose.msra.mxu0 0.0
    %180 = vmatprep.subr.mxu0 0.0
    %181 = vmatpush1.xpose.msra.mxu0 0.0
    %182 = vmatprep.subr.mxu0 0.0
    %183 = vmatpush1.xpose.msra.mxu0 0.0
    %184 = vmatprep.subr.mxu0 0.0
    %185 = vmatpush1.xpose.msra.mxu0 0.0
    %186 = vmatprep.subr.mxu0 0.0
    %187 = vmatpush1.xpose.msra.mxu0 0.0
    %188 = vmatprep.subr.mxu0 0.0
    %189 = vmatpush1.xpose.msra.mxu0 0.0
    %190 = vmatprep.subr.mxu0 0.0
    %191 = vmatpush1.xpose.msra.mxu0 0.0
    %192 = vmatprep.subr.mxu0 0.0
    %193 = vmatpush1.xpose.msra.mxu0 0.0
    %194 = vmatprep.subr.mxu0 0.0
    %195 = vmatpush1.xpose.msra.mxu0 0.0
    %196 = vmatprep.subr.mxu0 0.0
    %197 = vmatpush1.xpose.msra.mxu0 0.0
    %198 = vmatprep.subr.mxu0 0.0
    %199 = vmatpush1.xpose.msra.mxu0 0.0
    %200 = vmatprep.subr.mxu0 0.0
    %201 = vmatpush1.xpose.msra.mxu0 0.0
    %202 = vmatprep.subr.mxu0 0.0
    %203 = vmatpush1.xpose.msra.mxu0 0.0
    %204 = vmatprep.subr.mxu0 0.0
    %205 = vmatpush1.xpose.msra.mxu0 0.0
    %206 = vmatprep.subr.mxu0 0.0
    %207 = vmatpush1.xpose.msra.mxu0 0.0
    %208 = vmatprep.subr.mxu0 0.0
    %209 = vmatpush1.xpose.msra.mxu0 0.0
    %210 = vmatprep.subr.mxu0 0.0
    %211 = vmatpush1.xpose.msra.mxu0 0.0
    %212 = vmatprep.mubr.f32.mxu0 0.0
    %213 = vmatmul.mubr.f32.gmra.mrb[0].mxu0 %v144
    %v214 = vpop.f32.mrb[0].mxu0
    %v215 = vadd.f32 %v139, %v214
    %v216 = vpop.f32.mrb[0].mxu0
    %217 = vdwg.mxu0
    %v218 = vsel %vm143, %v215, -inf
    %219 = vmax.xlane.f32.xlu0 %v218
    %v220 = vpop.xlane.xlu0 %219
    %v221 = vsub.f32 %v215, %v220
    %v222 = vmul.f32 %v221, 1.442695
    %v223 = vpow.pop %v222
    %v224 = vsel %vm143, %v223, 0.0
    %225 = vadd.xlane.f32.xlu0 %v224
    %v226 = vpop.xlane.xlu0 %225
    %v227 = vrcp.pop %v226
    %v228 = vmul.f32 %v223, %v227
    %229 = vrot.lane.b32.xlu0 %v126, 64
    %v230 = vpop.permute.xlu0 %229
    %v233 = vsel %vm143, %v228, 0
    %235 = vmatprep.subr.mxu0 0.0
    %236 = vmatpush1.msra.mxu0 %v230
    %237 = vmatprep.subr.mxu0 0.0
    %238 = vmatpush1.msra.mxu0 0.0
    %239 = vmatprep.subr.mxu0 0.0
    %240 = vmatpush1.msra.mxu0 0.0
    %241 = vmatprep.subr.mxu0 0.0
    %242 = vmatpush1.msra.mxu0 0.0
    %243 = vmatprep.subr.mxu0 0.0
    %244 = vmatpush1.msra.mxu0 0.0
    %245 = vmatprep.subr.mxu0 0.0
    %246 = vmatpush1.msra.mxu0 0.0
    %247 = vmatprep.subr.mxu0 0.0
    %248 = vmatpush1.msra.mxu0 0.0
    %249 = vmatprep.subr.mxu0 0.0
    %250 = vmatpush1.msra.mxu0 0.0
    %251 = vmatprep.subr.mxu0 0.0
    %252 = vmatpush1.msra.mxu0 0.0
    %253 = vmatprep.subr.mxu0 0.0
    %254 = vmatpush1.msra.mxu0 0.0
    %255 = vmatprep.subr.mxu0 0.0
    %256 = vmatpush1.msra.mxu0 0.0
    %257 = vmatprep.subr.mxu0 0.0
    %258 = vmatpush1.msra.mxu0 0.0
    %259 = vmatprep.subr.mxu0 0.0
    %260 = vmatpush1.msra.mxu0 0.0
    %261 = vmatprep.subr.mxu0 0.0
    %262 = vmatpush1.msra.mxu0 0.0
    %263 = vmatprep.subr.mxu0 0.0
    %264 = vmatpush1.msra.mxu0 0.0
    %265 = vmatprep.subr.mxu0 0.0
    %266 = vmatpush1.msra.mxu0 0.0
    %267 = vmatprep.subr.mxu0 0.0
    %268 = vmatpush1.msra.mxu0 0.0
    %269 = vmatprep.subr.mxu0 0.0
    %270 = vmatpush1.msra.mxu0 0.0
    %271 = vmatprep.subr.mxu0 0.0
    %272 = vmatpush1.msra.mxu0 0.0
    %273 = vmatprep.subr.mxu0 0.0
    %274 = vmatpush1.msra.mxu0 0.0
    %275 = vmatprep.subr.mxu0 0.0
    %276 = vmatpush1.msra.mxu0 0.0
    %277 = vmatprep.subr.mxu0 0.0
    %278 = vmatpush1.msra.mxu0 0.0
    %279 = vmatprep.subr.mxu0 0.0
    %280 = vmatpush1.msra.mxu0 0.0
    %281 = vmatprep.subr.mxu0 0.0
    %282 = vmatpush1.msra.mxu0 0.0
    %283 = vmatprep.subr.mxu0 0.0
    %284 = vmatpush1.msra.mxu0 0.0
    %285 = vmatprep.subr.mxu0 0.0
    %286 = vmatpush1.msra.mxu0 0.0
    %287 = vmatprep.subr.mxu0 0.0
    %288 = vmatpush1.msra.mxu0 0.0
    %289 = vmatprep.subr.mxu0 0.0
    %290 = vmatpush1.msra.mxu0 0.0
    %291 = vmatprep.subr.mxu0 0.0
    %292 = vmatpush1.msra.mxu0 0.0
    %293 = vmatprep.subr.mxu0 0.0
    %294 = vmatpush1.msra.mxu0 0.0
    %295 = vmatprep.subr.mxu0 0.0
    %296 = vmatpush1.msra.mxu0 0.0
    %297 = vmatprep.subr.mxu0 0.0
    %298 = vmatpush1.msra.mxu0 0.0
    %299 = vmatprep.mubr.f32.mxu0 0.0
    %300 = vmatmul.mubr.f32.gmra.mrb[0].mxu0 %v233
    %v301 = vpop.f32.mrb[0].mxu0
    %v302 = vadd.f32 0.0, %v301
    %v303 = vpop.f32.mrb[0].mxu0
    %304 = vdwg.mxu0
    %305 = vst.msk [vmem:[#allocation2] sm:$0xff] %vm143, %v302
    %306 = vrot.lane.b32.xlu0 %v126, 120
    %v307 = vpop.permute.xlu0 %306
    %308 = vrot.lane.b32.xlu0 %v126, 88
    %v309 = vpop.permute.xlu0 %308
    %v310 = vsel %vm143, %v307, 0
    %v312 = vsel %vm143, %v309, 0
    %314 = vmatprep.subr.mxu0 0.0
    %315 = vmatpush1.xpose.msra.mxu0 %v312
    %316 = vmatprep.subr.mxu0 0.0
    %317 = vmatpush1.xpose.msra.mxu0 0.0
    %318 = vmatprep.subr.mxu0 0.0
    %319 = vmatpush1.xpose.msra.mxu0 0.0
    %320 = vmatprep.subr.mxu0 0.0
    %321 = vmatpush1.xpose.msra.mxu0 0.0
    %322 = vmatprep.subr.mxu0 0.0
    %323 = vmatpush1.xpose.msra.mxu0 0.0
    %324 = vmatprep.subr.mxu0 0.0
    %325 = vmatpush1.xpose.msra.mxu0 0.0
    %326 = vmatprep.subr.mxu0 0.0
    %327 = vmatpush1.xpose.msra.mxu0 0.0
    %328 = vmatprep.subr.mxu0 0.0
    %329 = vmatpush1.xpose.msra.mxu0 0.0
    %330 = vmatprep.subr.mxu0 0.0
    %331 = vmatpush1.xpose.msra.mxu0 0.0
    %332 = vmatprep.subr.mxu0 0.0
    %333 = vmatpush1.xpose.msra.mxu0 0.0
    %334 = vmatprep.subr.mxu0 0.0
    %335 = vmatpush1.xpose.msra.mxu0 0.0
    %336 = vmatprep.subr.mxu0 0.0
    %337 = vmatpush1.xpose.msra.mxu0 0.0
    %338 = vmatprep.subr.mxu0 0.0
    %339 = vmatpush1.xpose.msra.mxu0 0.0
    %340 = vmatprep.subr.mxu0 0.0
    %341 = vmatpush1.xpose.msra.mxu0 0.0
    %342 = vmatprep.subr.mxu0 0.0
    %343 = vmatpush1.xpose.msra.mxu0 0.0
    %344 = vmatprep.subr.mxu0 0.0
    %345 = vmatpush1.xpose.msra.mxu0 0.0
    %346 = vmatprep.subr.mxu0 0.0
    %347 = vmatpush1.xpose.msra.mxu0 0.0
    %348 = vmatprep.subr.mxu0 0.0
    %349 = vmatpush1.xpose.msra.mxu0 0.0
    %350 = vmatprep.subr.mxu0 0.0
    %351 = vmatpush1.xpose.msra.mxu0 0.0
    %352 = vmatprep.subr.mxu0 0.0
    %353 = vmatpush1.xpose.msra.mxu0 0.0
    %354 = vmatprep.subr.mxu0 0.0
    %355 = vmatpush1.xpose.msra.mxu0 0.0
    %356 = vmatprep.subr.mxu0 0.0
    %357 = vmatpush1.xpose.msra.mxu0 0.0
    %358 = vmatprep.subr.mxu0 0.0
    %359 = vmatpush1.xpose.msra.mxu0 0.0
    %360 = vmatprep.subr.mxu0 0.0
    %361 = vmatpush1.xpose.msra.mxu0 0.0
    %362 = vmatprep.subr.mxu0 0.0
    %363 = vmatpush1.xpose.msra.mxu0 0.0
    %364 = vmatprep.subr.mxu0 0.0
    %365 = vmatpush1.xpose.msra.mxu0 0.0
    %366 = vmatprep.subr.mxu0 0.0
    %367 = vmatpush1.xpose.msra.mxu0 0.0
    %368 = vmatprep.subr.mxu0 0.0
    %369 = vmatpush1.xpose.msra.mxu0 0.0
    %370 = vmatprep.subr.mxu0 0.0
    %371 = vmatpush1.xpose.msra.mxu0 0.0
    %372 = vmatprep.subr.mxu0 0.0
    %373 = vmatpush1.xpose.msra.mxu0 0.0
    %374 = vmatprep.subr.mxu0 0.0
    %375 = vmatpush1.xpose.msra.mxu0 0.0
    %376 = vmatprep.subr.mxu0 0.0
    %377 = vmatpush1.xpose.msra.mxu0 0.0
    %378 = vmatprep.mubr.f32.mxu0 0.0
    %379 = vmatmul.mubr.f32.gmra.mrb[0].mxu0 %v310
    %v380 = vpop.f32.mrb[0].mxu0
    %v381 = vadd.f32 %v139, %v380
    %v382 = vpop.f32.mrb[0].mxu0
    %383 = vdwg.mxu0
    %v384 = vsel %vm143, %v381, -inf
    %385 = vmax.xlane.f32.xlu0 %v384
    %v386 = vpop.xlane.xlu0 %385
    %v387 = vsub.f32 %v381, %v386
    %v388 = vmul.f32 %v387, 1.442695
    %v389 = vpow.pop %v388
    %v390 = vsel %vm143, %v389, 0.0
    %391 = vadd.xlane.f32.xlu0 %v390
    %v392 = vpop.xlane.xlu0 %391
    %v393 = vrcp.pop %v392
    %v394 = vmul.f32 %v389, %v393
    %395 = vrot.lane.b32.xlu0 %v126, 56
    %v396 = vpop.permute.xlu0 %395
    %v399 = vsel %vm143, %v394, 0
    %401 = vmatprep.subr.mxu0 0.0
    %402 = vmatpush1.msra.mxu0 %v396
    %403 = vmatprep.subr.mxu0 0.0
    %404 = vmatpush1.msra.mxu0 0.0
    %405 = vmatprep.subr.mxu0 0.0
    %406 = vmatpush1.msra.mxu0 0.0
    %407 = vmatprep.subr.mxu0 0.0
    %408 = vmatpush1.msra.mxu0 0.0
    %409 = vmatprep.subr.mxu0 0.0
    %410 = vmatpush1.msra.mxu0 0.0
    %411 = vmatprep.subr.mxu0 0.0
    %412 = vmatpush1.msra.mxu0 0.0
    %413 = vmatprep.subr.mxu0 0.0
    %414 = vmatpush1.msra.mxu0 0.0
    %415 = vmatprep.subr.mxu0 0.0
    %416 = vmatpush1.msra.mxu0 0.0
    %417 = vmatprep.subr.mxu0 0.0
    %418 = vmatpush1.msra.mxu0 0.0
    %419 = vmatprep.subr.mxu0 0.0
    %420 = vmatpush1.msra.mxu0 0.0
    %421 = vmatprep.subr.mxu0 0.0
    %422 = vmatpush1.msra.mxu0 0.0
    %423 = vmatprep.subr.mxu0 0.0
    %424 = vmatpush1.msra.mxu0 0.0
    %425 = vmatprep.subr.mxu0 0.0
    %426 = vmatpush1.msra.mxu0 0.0
    %427 = vmatprep.subr.mxu0 0.0
    %428 = vmatpush1.msra.mxu0 0.0
    %429 = vmatprep.subr.mxu0 0.0
    %430 = vmatpush1.msra.mxu0 0.0
    %431 = vmatprep.subr.mxu0 0.0
    %432 = vmatpush1.msra.mxu0 0.0
    %433 = vmatprep.subr.mxu0 0.0
    %434 = vmatpush1.msra.mxu0 0.0
    %435 = vmatprep.subr.mxu0 0.0
    %436 = vmatpush1.msra.mxu0 0.0
    %437 = vmatprep.subr.mxu0 0.0
    %438 = vmatpush1.msra.mxu0 0.0
    %439 = vmatprep.subr.mxu0 0.0
    %440 = vmatpush1.msra.mxu0 0.0
    %441 = vmatprep.subr.mxu0 0.0
    %442 = vmatpush1.msra.mxu0 0.0
    %443 = vmatprep.subr.mxu0 0.0
    %444 = vmatpush1.msra.mxu0 0.0
    %445 = vmatprep.subr.mxu0 0.0
    %446 = vmatpush1.msra.mxu0 0.0
    %447 = vmatprep.subr.mxu0 0.0
    %448 = vmatpush1.msra.mxu0 0.0
    %449 = vmatprep.subr.mxu0 0.0
    %450 = vmatpush1.msra.mxu0 0.0
    %451 = vmatprep.subr.mxu0 0.0
    %452 = vmatpush1.msra.mxu0 0.0
    %453 = vmatprep.subr.mxu0 0.0
    %454 = vmatpush1.msra.mxu0 0.0
    %455 = vmatprep.subr.mxu0 0.0
    %456 = vmatpush1.msra.mxu0 0.0
    %457 = vmatprep.subr.mxu0 0.0
    %458 = vmatpush1.msra.mxu0 0.0
    %459 = vmatprep.subr.mxu0 0.0
    %460 = vmatpush1.msra.mxu0 0.0
    %461 = vmatprep.subr.mxu0 0.0
    %462 = vmatpush1.msra.mxu0 0.0
    %463 = vmatprep.subr.mxu0 0.0
    %464 = vmatpush1.msra.mxu0 0.0
    %465 = vmatprep.mubr.f32.mxu0 0.0
    %466 = vmatmul.mubr.f32.gmra.mrb[0].mxu0 %v399
    %v467 = vpop.f32.mrb[0].mxu0
    %v468 = vadd.f32 0.0, %v467
    %v469 = vpop.f32.mrb[0].mxu0
    %470 = vdwg.mxu0
    %472 = vrot.lane.b32.xlu0 %v468, 8
    %v473 = vpop.permute.xlu0 %472
    %vm475 = vcmask 130112
    %476 = vst.msk [vmem:[#allocation2] sm:$0xff] %vm475, %v473
    %477 = vrot.lane.b32.xlu0 %v126, 112
    %v478 = vpop.permute.xlu0 %477
    %479 = vrot.lane.b32.xlu0 %v126, 80
    %v480 = vpop.permute.xlu0 %479
    %v481 = vsel %vm143, %v478, 0
    %v483 = vsel %vm143, %v480, 0
    %485 = vmatprep.subr.mxu0 0.0
    %486 = vmatpush1.xpose.msra.mxu0 %v483
    %487 = vmatprep.subr.mxu0 0.0
    %488 = vmatpush1.xpose.msra.mxu0 0.0
    %489 = vmatprep.subr.mxu0 0.0
    %490 = vmatpush1.xpose.msra.mxu0 0.0
    %491 = vmatprep.subr.mxu0 0.0
    %492 = vmatpush1.xpose.msra.mxu0 0.0
    %493 = vmatprep.subr.mxu0 0.0
    %494 = vmatpush1.xpose.msra.mxu0 0.0
    %495 = vmatprep.subr.mxu0 0.0
    %496 = vmatpush1.xpose.msra.mxu0 0.0
    %497 = vmatprep.subr.mxu0 0.0
    %498 = vmatpush1.xpose.msra.mxu0 0.0
    %499 = vmatprep.subr.mxu0 0.0
    %500 = vmatpush1.xpose.msra.mxu0 0.0
    %501 = vmatprep.subr.mxu0 0.0
    %502 = vmatpush1.xpose.msra.mxu0 0.0
    %503 = vmatprep.subr.mxu0 0.0
    %504 = vmatpush1.xpose.msra.mxu0 0.0
    %505 = vmatprep.subr.mxu0 0.0
    %506 = vmatpush1.xpose.msra.mxu0 0.0
    %507 = vmatprep.subr.mxu0 0.0
    %508 = vmatpush1.xpose.msra.mxu0 0.0
    %509 = vmatprep.subr.mxu0 0.0
    %510 = vmatpush1.xpose.msra.mxu0 0.0
    %511 = vmatprep.subr.mxu0 0.0
    %512 = vmatpush1.xpose.msra.mxu0 0.0
    %513 = vmatprep.subr.mxu0 0.0
    %514 = vmatpush1.xpose.msra.mxu0 0.0
    %515 = vmatprep.subr.mxu0 0.0
    %516 = vmatpush1.xpose.msra.mxu0 0.0
    %517 = vmatprep.subr.mxu0 0.0
    %518 = vmatpush1.xpose.msra.mxu0 0.0
    %519 = vmatprep.subr.mxu0 0.0
    %520 = vmatpush1.xpose.msra.mxu0 0.0
    %521 = vmatprep.subr.mxu0 0.0
    %522 = vmatpush1.xpose.msra.mxu0 0.0
    %523 = vmatprep.subr.mxu0 0.0
    %524 = vmatpush1.xpose.msra.mxu0 0.0
    %525 = vmatprep.subr.mxu0 0.0
    %526 = vmatpush1.xpose.msra.mxu0 0.0
    %527 = vmatprep.subr.mxu0 0.0
    %528 = vmatpush1.xpose.msra.mxu0 0.0
    %529 = vmatprep.subr.mxu0 0.0
    %530 = vmatpush1.xpose.msra.mxu0 0.0
    %531 = vmatprep.subr.mxu0 0.0
    %532 = vmatpush1.xpose.msra.mxu0 0.0
    %533 = vmatprep.subr.mxu0 0.0
    %534 = vmatpush1.xpose.msra.mxu0 0.0
    %535 = vmatprep.subr.mxu0 0.0
    %536 = vmatpush1.xpose.msra.mxu0 0.0
    %537 = vmatprep.subr.mxu0 0.0
    %538 = vmatpush1.xpose.msra.mxu0 0.0
    %539 = vmatprep.subr.mxu0 0.0
    %540 = vmatpush1.xpose.msra.mxu0 0.0
    %541 = vmatprep.subr.mxu0 0.0
    %542 = vmatpush1.xpose.msra.mxu0 0.0
    %543 = vmatprep.subr.mxu0 0.0
    %544 = vmatpush1.xpose.msra.mxu0 0.0
    %545 = vmatprep.subr.mxu0 0.0
    %546 = vmatpush1.xpose.msra.mxu0 0.0
    %547 = vmatprep.subr.mxu0 0.0
    %548 = vmatpush1.xpose.msra.mxu0 0.0
    %549 = vmatprep.mubr.f32.mxu0 0.0
    %550 = vmatmul.mubr.f32.gmra.mrb[0].mxu0 %v481
    %v551 = vpop.f32.mrb[0].mxu0
    %v552 = vadd.f32 %v139, %v551
    %v553 = vpop.f32.mrb[0].mxu0
    %554 = vdwg.mxu0
    %v555 = vsel %vm143, %v552, -inf
    %556 = vmax.xlane.f32.xlu0 %v555
    %v557 = vpop.xlane.xlu0 %556
    %v558 = vsub.f32 %v552, %v557
    %v559 = vmul.f32 %v558, 1.442695
    %v560 = vpow.pop %v559
    %v561 = vsel %vm143, %v560, 0.0
    %562 = vadd.xlane.f32.xlu0 %v561
    %v563 = vpop.xlane.xlu0 %562
    %v564 = vrcp.pop %v563
    %v565 = vmul.f32 %v560, %v564
    %566 = vrot.lane.b32.xlu0 %v126, 48
    %v567 = vpop.permute.xlu0 %566
    %v570 = vsel %vm143, %v565, 0
    %572 = vmatprep.subr.mxu0 0.0
    %573 = vmatpush1.msra.mxu0 %v567
    %574 = vmatprep.subr.mxu0 0.0
    %575 = vmatpush1.msra.mxu0 0.0
    %576 = vmatprep.subr.mxu0 0.0
    %577 = vmatpush1.msra.mxu0 0.0
    %578 = vmatprep.subr.mxu0 0.0
    %579 = vmatpush1.msra.mxu0 0.0
    %580 = vmatprep.subr.mxu0 0.0
    %581 = vmatpush1.msra.mxu0 0.0
    %582 = vmatprep.subr.mxu0 0.0
    %583 = vmatpush1.msra.mxu0 0.0
    %584 = vmatprep.subr.mxu0 0.0
    %585 = vmatpush1.msra.mxu0 0.0
    %586 = vmatprep.subr.mxu0 0.0
    %587 = vmatpush1.msra.mxu0 0.0
    %588 = vmatprep.subr.mxu0 0.0
    %589 = vmatpush1.msra.mxu0 0.0
    %590 = vmatprep.subr.mxu0 0.0
    %591 = vmatpush1.msra.mxu0 0.0
    %592 = vmatprep.subr.mxu0 0.0
    %593 = vmatpush1.msra.mxu0 0.0
    %594 = vmatprep.subr.mxu0 0.0
    %595 = vmatpush1.msra.mxu0 0.0
    %596 = vmatprep.subr.mxu0 0.0
    %597 = vmatpush1.msra.mxu0 0.0
    %598 = vmatprep.subr.mxu0 0.0
    %599 = vmatpush1.msra.mxu0 0.0
    %600 = vmatprep.subr.mxu0 0.0
    %601 = vmatpush1.msra.mxu0 0.0
    %602 = vmatprep.subr.mxu0 0.0
    %603 = vmatpush1.msra.mxu0 0.0
    %604 = vmatprep.subr.mxu0 0.0
    %605 = vmatpush1.msra.mxu0 0.0
    %606 = vmatprep.subr.mxu0 0.0
    %607 = vmatpush1.msra.mxu0 0.0
    %608 = vmatprep.subr.mxu0 0.0
    %609 = vmatpush1.msra.mxu0 0.0
    %610 = vmatprep.subr.mxu0 0.0
    %611 = vmatpush1.msra.mxu0 0.0
    %612 = vmatprep.subr.mxu0 0.0
    %613 = vmatpush1.msra.mxu0 0.0
    %614 = vmatprep.subr.mxu0 0.0
    %615 = vmatpush1.msra.mxu0 0.0
    %616 = vmatprep.subr.mxu0 0.0
    %617 = vmatpush1.msra.mxu0 0.0
    %618 = vmatprep.subr.mxu0 0.0
    %619 = vmatpush1.msra.mxu0 0.0
    %620 = vmatprep.subr.mxu0 0.0
    %621 = vmatpush1.msra.mxu0 0.0
    %622 = vmatprep.subr.mxu0 0.0
    %623 = vmatpush1.msra.mxu0 0.0
    %624 = vmatprep.subr.mxu0 0.0
    %625 = vmatpush1.msra.mxu0 0.0
    %626 = vmatprep.subr.mxu0 0.0
    %627 = vmatpush1.msra.mxu0 0.0
    %628 = vmatprep.subr.mxu0 0.0
    %629 = vmatpush1.msra.mxu0 0.0
    %630 = vmatprep.subr.mxu0 0.0
    %631 = vmatpush1.msra.mxu0 0.0
    %632 = vmatprep.subr.mxu0 0.0
    %633 = vmatpush1.msra.mxu0 0.0
    %634 = vmatprep.subr.mxu0 0.0
    %635 = vmatpush1.msra.mxu0 0.0
    %636 = vmatprep.mubr.f32.mxu0 0.0
    %637 = vmatmul.mubr.f32.gmra.mrb[0].mxu0 %v570
    %v638 = vpop.f32.mrb[0].mxu0
    %v639 = vadd.f32 0.0, %v638
    %v640 = vpop.f32.mrb[0].mxu0
    %641 = vdwg.mxu0
    %643 = vrot.lane.b32.xlu0 %v639, 16
    %v644 = vpop.permute.xlu0 %643
    %vm646 = vcmask 195712
    %647 = vst.msk [vmem:[#allocation2] sm:$0xff] %vm646, %v644
    %648 = vrot.lane.b32.xlu0 %v126, 104
    %v649 = vpop.permute.xlu0 %648
    %650 = vrot.lane.b32.xlu0 %v126, 72
    %v651 = vpop.permute.xlu0 %650
    %v652 = vsel %vm143, %v649, 0
    %v654 = vsel %vm143, %v651, 0
    %656 = vmatprep.subr.mxu0 0.0
    %657 = vmatpush1.xpose.msra.mxu0 %v654
    %658 = vmatprep.subr.mxu0 0.0
    %659 = vmatpush1.xpose.msra.mxu0 0.0
    %660 = vmatprep.subr.mxu0 0.0
    %661 = vmatpush1.xpose.msra.mxu0 0.0
    %662 = vmatprep.subr.mxu0 0.0
    %663 = vmatpush1.xpose.msra.mxu0 0.0
    %664 = vmatprep.subr.mxu0 0.0
    %665 = vmatpush1.xpose.msra.mxu0 0.0
    %666 = vmatprep.subr.mxu0 0.0
    %667 = vmatpush1.xpose.msra.mxu0 0.0
    %668 = vmatprep.subr.mxu0 0.0
    %669 = vmatpush1.xpose.msra.mxu0 0.0
    %670 = vmatprep.subr.mxu0 0.0
    %671 = vmatpush1.xpose.msra.mxu0 0.0
    %672 = vmatprep.subr.mxu0 0.0
    %673 = vmatpush1.xpose.msra.mxu0 0.0
    %674 = vmatprep.subr.mxu0 0.0
    %675 = vmatpush1.xpose.msra.mxu0 0.0
    %676 = vmatprep.subr.mxu0 0.0
    %677 = vmatpush1.xpose.msra.mxu0 0.0
    %678 = vmatprep.subr.mxu0 0.0
    %679 = vmatpush1.xpose.msra.mxu0 0.0
    %680 = vmatprep.subr.mxu0 0.0
    %681 = vmatpush1.xpose.msra.mxu0 0.0
    %682 = vmatprep.subr.mxu0 0.0
    %683 = vmatpush1.xpose.msra.mxu0 0.0
    %684 = vmatprep.subr.mxu0 0.0
    %685 = vmatpush1.xpose.msra.mxu0 0.0
    %686 = vmatprep.subr.mxu0 0.0
    %687 = vmatpush1.xpose.msra.mxu0 0.0
    %688 = vmatprep.subr.mxu0 0.0
    %689 = vmatpush1.xpose.msra.mxu0 0.0
    %690 = vmatprep.subr.mxu0 0.0
    %691 = vmatpush1.xpose.msra.mxu0 0.0
    %692 = vmatprep.subr.mxu0 0.0
    %693 = vmatpush1.xpose.msra.mxu0 0.0
    %694 = vmatprep.subr.mxu0 0.0
    %695 = vmatpush1.xpose.msra.mxu0 0.0
    %696 = vmatprep.subr.mxu0 0.0
    %697 = vmatpush1.xpose.msra.mxu0 0.0
    %698 = vmatprep.subr.mxu0 0.0
    %699 = vmatpush1.xpose.msra.mxu0 0.0
    %700 = vmatprep.subr.mxu0 0.0
    %701 = vmatpush1.xpose.msra.mxu0 0.0
    %702 = vmatprep.subr.mxu0 0.0
    %703 = vmatpush1.xpose.msra.mxu0 0.0
    %704 = vmatprep.subr.mxu0 0.0
    %705 = vmatpush1.xpose.msra.mxu0 0.0
    %706 = vmatprep.subr.mxu0 0.0
    %707 = vmatpush1.xpose.msra.mxu0 0.0
    %708 = vmatprep.subr.mxu0 0.0
    %709 = vmatpush1.xpose.msra.mxu0 0.0
    %710 = vmatprep.subr.mxu0 0.0
    %711 = vmatpush1.xpose.msra.mxu0 0.0
    %712 = vmatprep.subr.mxu0 0.0
    %713 = vmatpush1.xpose.msra.mxu0 0.0
    %714 = vmatprep.subr.mxu0 0.0
    %715 = vmatpush1.xpose.msra.mxu0 0.0
    %716 = vmatprep.subr.mxu0 0.0
    %717 = vmatpush1.xpose.msra.mxu0 0.0
    %718 = vmatprep.subr.mxu0 0.0
    %719 = vmatpush1.xpose.msra.mxu0 0.0
    %720 = vmatprep.mubr.f32.mxu0 0.0
    %721 = vmatmul.mubr.f32.gmra.mrb[0].mxu0 %v652
    %v722 = vpop.f32.mrb[0].mxu0
    %v723 = vadd.f32 %v139, %v722
    %v724 = vpop.f32.mrb[0].mxu0
    %725 = vdwg.mxu0
    %v726 = vsel %vm143, %v723, -inf
    %727 = vmax.xlane.f32.xlu0 %v726
    %v728 = vpop.xlane.xlu0 %727
    %v729 = vsub.f32 %v723, %v728
    %v730 = vmul.f32 %v729, 1.442695
    %v731 = vpow.pop %v730
    %v732 = vsel %vm143, %v731, 0.0
    %733 = vadd.xlane.f32.xlu0 %v732
    %v734 = vpop.xlane.xlu0 %733
    %v735 = vrcp.pop %v734
    %v736 = vmul.f32 %v731, %v735
    %737 = vrot.lane.b32.xlu0 %v126, 40
    %v738 = vpop.permute.xlu0 %737
    %v741 = vsel %vm143, %v736, 0
    %743 = vmatprep.subr.mxu0 0.0
    %744 = vmatpush1.msra.mxu0 %v738
    %745 = vmatprep.subr.mxu0 0.0
    %746 = vmatpush1.msra.mxu0 0.0
    %747 = vmatprep.subr.mxu0 0.0
    %748 = vmatpush1.msra.mxu0 0.0
    %749 = vmatprep.subr.mxu0 0.0
    %750 = vmatpush1.msra.mxu0 0.0
    %751 = vmatprep.subr.mxu0 0.0
    %752 = vmatpush1.msra.mxu0 0.0
    %753 = vmatprep.subr.mxu0 0.0
    %754 = vmatpush1.msra.mxu0 0.0
    %755 = vmatprep.subr.mxu0 0.0
    %756 = vmatpush1.msra.mxu0 0.0
    %757 = vmatprep.subr.mxu0 0.0
    %758 = vmatpush1.msra.mxu0 0.0
    %759 = vmatprep.subr.mxu0 0.0
    %760 = vmatpush1.msra.mxu0 0.0
    %761 = vmatprep.subr.mxu0 0.0
    %762 = vmatpush1.msra.mxu0 0.0
    %763 = vmatprep.subr.mxu0 0.0
    %764 = vmatpush1.msra.mxu0 0.0
    %765 = vmatprep.subr.mxu0 0.0
    %766 = vmatpush1.msra.mxu0 0.0
    %767 = vmatprep.subr.mxu0 0.0
    %768 = vmatpush1.msra.mxu0 0.0
    %769 = vmatprep.subr.mxu0 0.0
    %770 = vmatpush1.msra.mxu0 0.0
    %771 = vmatprep.subr.mxu0 0.0
    %772 = vmatpush1.msra.mxu0 0.0
    %773 = vmatprep.subr.mxu0 0.0
    %774 = vmatpush1.msra.mxu0 0.0
    %775 = vmatprep.subr.mxu0 0.0
    %776 = vmatpush1.msra.mxu0 0.0
    %777 = vmatprep.subr.mxu0 0.0
    %778 = vmatpush1.msra.mxu0 0.0
    %779 = vmatprep.subr.mxu0 0.0
    %780 = vmatpush1.msra.mxu0 0.0
    %781 = vmatprep.subr.mxu0 0.0
    %782 = vmatpush1.msra.mxu0 0.0
    %783 = vmatprep.subr.mxu0 0.0
    %784 = vmatpush1.msra.mxu0 0.0
    %785 = vmatprep.subr.mxu0 0.0
    %786 = vmatpush1.msra.mxu0 0.0
    %787 = vmatprep.subr.mxu0 0.0
    %788 = vmatpush1.msra.mxu0 0.0
    %789 = vmatprep.subr.mxu0 0.0
    %790 = vmatpush1.msra.mxu0 0.0
    %791 = vmatprep.subr.mxu0 0.0
    %792 = vmatpush1.msra.mxu0 0.0
    %793 = vmatprep.subr.mxu0 0.0
    %794 = vmatpush1.msra.mxu0 0.0
    %795 = vmatprep.subr.mxu0 0.0
    %796 = vmatpush1.msra.mxu0 0.0
    %797 = vmatprep.subr.mxu0 0.0
    %798 = vmatpush1.msra.mxu0 0.0
    %799 = vmatprep.subr.mxu0 0.0
    %800 = vmatpush1.msra.mxu0 0.0
    %801 = vmatprep.subr.mxu0 0.0
    %802 = vmatpush1.msra.mxu0 0.0
    %803 = vmatprep.subr.mxu0 0.0
    %804 = vmatpush1.msra.mxu0 0.0
    %805 = vmatprep.subr.mxu0 0.0
    %806 = vmatpush1.msra.mxu0 0.0
    %807 = vmatprep.mubr.f32.mxu0 0.0
    %808 = vmatmul.mubr.f32.gmra.mrb[0].mxu0 %v741
    %v809 = vpop.f32.mrb[0].mxu0
    %v810 = vadd.f32 0.0, %v809
    %v811 = vpop.f32.mrb[0].mxu0
    %812 = vdwg.mxu0
    %814 = vrot.lane.b32.xlu0 %v810, 24
    %v815 = vpop.permute.xlu0 %814
    %vm817 = vcmask 261312
    %818 = vst.msk [vmem:[#allocation2] sm:$0xff] %vm817, %v815
    %v819 = vld [vmem:[%s1 + $0x1] sm:$0x1]
    %v820 = vmul.f32 %v819, -1e+09
    %v821 = vlaneseq
    %v822 = vshrl.u32 %v821, 7
    %v823 = vsub.s32 0, %v822
    %v824 = vrot.slane %v820, %v823
    %826 = vrot.lane.b32.xlu0 %v131, 96
    %v827 = vpop.permute.xlu0 %826
    %v828 = vsel %vm143, %v131, 0
    %v830 = vsel %vm143, %v827, 0
    %832 = vmatprep.subr.mxu0 0.0
    %833 = vmatpush1.xpose.msra.mxu0 %v830
    %834 = vmatprep.subr.mxu0 0.0
    %835 = vmatpush1.xpose.msra.mxu0 0.0
    %836 = vmatprep.subr.mxu0 0.0
    %837 = vmatpush1.xpose.msra.mxu0 0.0
    %838 = vmatprep.subr.mxu0 0.0
    %839 = vmatpush1.xpose.msra.mxu0 0.0
    %840 = vmatprep.subr.mxu0 0.0
    %841 = vmatpush1.xpose.msra.mxu0 0.0
    %842 = vmatprep.subr.mxu0 0.0
    %843 = vmatpush1.xpose.msra.mxu0 0.0
    %844 = vmatprep.subr.mxu0 0.0
    %845 = vmatpush1.xpose.msra.mxu0 0.0
    %846 = vmatprep.subr.mxu0 0.0
    %847 = vmatpush1.xpose.msra.mxu0 0.0
    %848 = vmatprep.subr.mxu0 0.0
    %849 = vmatpush1.xpose.msra.mxu0 0.0
    %850 = vmatprep.subr.mxu0 0.0
    %851 = vmatpush1.xpose.msra.mxu0 0.0
    %852 = vmatprep.subr.mxu0 0.0
    %853 = vmatpush1.xpose.msra.mxu0 0.0
    %854 = vmatprep.subr.mxu0 0.0
    %855 = vmatpush1.xpose.msra.mxu0 0.0
    %856 = vmatprep.subr.mxu0 0.0
    %857 = vmatpush1.xpose.msra.mxu0 0.0
    %858 = vmatprep.subr.mxu0 0.0
    %859 = vmatpush1.xpose.msra.mxu0 0.0
    %860 = vmatprep.subr.mxu0 0.0
    %861 = vmatpush1.xpose.msra.mxu0 0.0
    %862 = vmatprep.subr.mxu0 0.0
    %863 = vmatpush1.xpose.msra.mxu0 0.0
    %864 = vmatprep.subr.mxu0 0.0
    %865 = vmatpush1.xpose.msra.mxu0 0.0
    %866 = vmatprep.subr.mxu0 0.0
    %867 = vmatpush1.xpose.msra.mxu0 0.0
    %868 = vmatprep.subr.mxu0 0.0
    %869 = vmatpush1.xpose.msra.mxu0 0.0
    %870 = vmatprep.subr.mxu0 0.0
    %871 = vmatpush1.xpose.msra.mxu0 0.0
    %872 = vmatprep.subr.mxu0 0.0
    %873 = vmatpush1.xpose.msra.mxu0 0.0
    %874 = vmatprep.subr.mxu0 0.0
    %875 = vmatpush1.xpose.msra.mxu0 0.0
    %876 = vmatprep.subr.mxu0 0.0
    %877 = vmatpush1.xpose.msra.mxu0 0.0
    %878 = vmatprep.subr.mxu0 0.0
    %879 = vmatpush1.xpose.msra.mxu0 0.0
    %880 = vmatprep.subr.mxu0 0.0
    %881 = vmatpush1.xpose.msra.mxu0 0.0
    %882 = vmatprep.subr.mxu0 0.0
    %883 = vmatpush1.xpose.msra.mxu0 0.0
    %884 = vmatprep.subr.mxu0 0.0
    %885 = vmatpush1.xpose.msra.mxu0 0.0
    %886 = vmatprep.subr.mxu0 0.0
    %887 = vmatpush1.xpose.msra.mxu0 0.0
    %888 = vmatprep.subr.mxu0 0.0
    %889 = vmatpush1.xpose.msra.mxu0 0.0
    %890 = vmatprep.subr.mxu0 0.0
    %891 = vmatpush1.xpose.msra.mxu0 0.0
    %892 = vmatprep.subr.mxu0 0.0
    %893 = vmatpush1.xpose.msra.mxu0 0.0
    %894 = vmatprep.subr.mxu0 0.0
    %895 = vmatpush1.xpose.msra.mxu0 0.0
    %896 = vmatprep.mubr.f32.mxu0 0.0
    %897 = vmatmul.mubr.f32.gmra.mrb[0].mxu0 %v828
    %v898 = vpop.f32.mrb[0].mxu0
    %v899 = vadd.f32 %v824, %v898
    %v900 = vpop.f32.mrb[0].mxu0
    %901 = vdwg.mxu0
    %v902 = vsel %vm143, %v899, -inf
    %903 = vmax.xlane.f32.xlu0 %v902
    %v904 = vpop.xlane.xlu0 %903
    %v905 = vsub.f32 %v899, %v904
    %v906 = vmul.f32 %v905, 1.442695
    %v907 = vpow.pop %v906
    %v908 = vsel %vm143, %v907, 0.0
    %909 = vadd.xlane.f32.xlu0 %v908
    %v910 = vpop.xlane.xlu0 %909
    %v911 = vrcp.pop %v910
    %v912 = vmul.f32 %v907, %v911
    %913 = vrot.lane.b32.xlu0 %v131, 64
    %v914 = vpop.permute.xlu0 %913
    %v917 = vsel %vm143, %v912, 0
    %919 = vmatprep.subr.mxu0 0.0
    %920 = vmatpush1.msra.mxu0 %v914
    %921 = vmatprep.subr.mxu0 0.0
    %922 = vmatpush1.msra.mxu0 0.0
    %923 = vmatprep.subr.mxu0 0.0
    %924 = vmatpush1.msra.mxu0 0.0
    %925 = vmatprep.subr.mxu0 0.0
    %926 = vmatpush1.msra.mxu0 0.0
    %927 = vmatprep.subr.mxu0 0.0
    %928 = vmatpush1.msra.mxu0 0.0
    %929 = vmatprep.subr.mxu0 0.0
    %930 = vmatpush1.msra.mxu0 0.0
    %931 = vmatprep.subr.mxu0 0.0
    %932 = vmatpush1.msra.mxu0 0.0
    %933 = vmatprep.subr.mxu0 0.0
    %934 = vmatpush1.msra.mxu0 0.0
    %935 = vmatprep.subr.mxu0 0.0
    %936 = vmatpush1.msra.mxu0 0.0
    %937 = vmatprep.subr.mxu0 0.0
    %938 = vmatpush1.msra.mxu0 0.0
    %939 = vmatprep.subr.mxu0 0.0
    %940 = vmatpush1.msra.mxu0 0.0
    %941 = vmatprep.subr.mxu0 0.0
    %942 = vmatpush1.msra.mxu0 0.0
    %943 = vmatprep.subr.mxu0 0.0
    %944 = vmatpush1.msra.mxu0 0.0
    %945 = vmatprep.subr.mxu0 0.0
    %946 = vmatpush1.msra.mxu0 0.0
    %947 = vmatprep.subr.mxu0 0.0
    %948 = vmatpush1.msra.mxu0 0.0
    %949 = vmatprep.subr.mxu0 0.0
    %950 = vmatpush1.msra.mxu0 0.0
    %951 = vmatprep.subr.mxu0 0.0
    %952 = vmatpush1.msra.mxu0 0.0
    %953 = vmatprep.subr.mxu0 0.0
    %954 = vmatpush1.msra.mxu0 0.0
    %955 = vmatprep.subr.mxu0 0.0
    %956 = vmatpush1.msra.mxu0 0.0
    %957 = vmatprep.subr.mxu0 0.0
    %958 = vmatpush1.msra.mxu0 0.0
    %959 = vmatprep.subr.mxu0 0.0
    %960 = vmatpush1.msra.mxu0 0.0
    %961 = vmatprep.subr.mxu0 0.0
    %962 = vmatpush1.msra.mxu0 0.0
    %963 = vmatprep.subr.mxu0 0.0
    %964 = vmatpush1.msra.mxu0 0.0
    %965 = vmatprep.subr.mxu0 0.0
    %966 = vmatpush1.msra.mxu0 0.0
    %967 = vmatprep.subr.mxu0 0.0
    %968 = vmatpush1.msra.mxu0 0.0
    %969 = vmatprep.subr.mxu0 0.0
    %970 = vmatpush1.msra.mxu0 0.0
    %971 = vmatprep.subr.mxu0 0.0
    %972 = vmatpush1.msra.mxu0 0.0
    %973 = vmatprep.subr.mxu0 0.0
    %974 = vmatpush1.msra.mxu0 0.0
    %975 = vmatprep.subr.mxu0 0.0
    %976 = vmatpush1.msra.mxu0 0.0
    %977 = vmatprep.subr.mxu0 0.0
    %978 = vmatpush1.msra.mxu0 0.0
    %979 = vmatprep.subr.mxu0 0.0
    %980 = vmatpush1.msra.mxu0 0.0
    %981 = vmatprep.subr.mxu0 0.0
    %982 = vmatpush1.msra.mxu0 0.0
    %983 = vmatprep.mubr.f32.mxu0 0.0
    %984 = vmatmul.mubr.f32.gmra.mrb[0].mxu0 %v917
    %v985 = vpop.f32.mrb[0].mxu0
    %v986 = vadd.f32 0.0, %v985
    %v987 = vpop.f32.mrb[0].mxu0
    %988 = vdwg.mxu0
    %989 = vst.msk [vmem:[#allocation2 + $0x8] sm:$0xff] %vm143, %v986
    %990 = vrot.lane.b32.xlu0 %v131, 120
    %v991 = vpop.permute.xlu0 %990
    %992 = vrot.lane.b32.xlu0 %v131, 88
    %v993 = vpop.permute.xlu0 %992
    %v994 = vsel %vm143, %v991, 0
    %v996 = vsel %vm143, %v993, 0
    %998 = vmatprep.subr.mxu0 0.0
    %999 = vmatpush1.xpose.msra.mxu0 %v996
    %1000 = vmatprep.subr.mxu0 0.0
    %1001 = vmatpush1.xpose.msra.mxu0 0.0
    %1002 = vmatprep.subr.mxu0 0.0
    %1003 = vmatpush1.xpose.msra.mxu0 0.0
    %1004 = vmatprep.subr.mxu0 0.0
    %1005 = vmatpush1.xpose.msra.mxu0 0.0
    %1006 = vmatprep.subr.mxu0 0.0
    %1007 = vmatpush1.xpose.msra.mxu0 0.0
    %1008 = vmatprep.subr.mxu0 0.0
    %1009 = vmatpush1.xpose.msra.mxu0 0.0
    %1010 = vmatprep.subr.mxu0 0.0
    %1011 = vmatpush1.xpose.msra.mxu0 0.0
    %1012 = vmatprep.subr.mxu0 0.0
    %1013 = vmatpush1.xpose.msra.mxu0 0.0
    %1014 = vmatprep.subr.mxu0 0.0
    %1015 = vmatpush1.xpose.msra.mxu0 0.0
    %1016 = vmatprep.subr.mxu0 0.0
    %1017 = vmatpush1.xpose.msra.mxu0 0.0
    %1018 = vmatprep.subr.mxu0 0.0
    %1019 = vmatpush1.xpose.msra.mxu0 0.0
    %1020 = vmatprep.subr.mxu0 0.0
    %1021 = vmatpush1.xpose.msra.mxu0 0.0
    %1022 = vmatprep.subr.mxu0 0.0
    %1023 = vmatpush1.xpose.msra.mxu0 0.0
    %1024 = vmatprep.subr.mxu0 0.0
    %1025 = vmatpush1.xpose.msra.mxu0 0.0
    %1026 = vmatprep.subr.mxu0 0.0
    %1027 = vmatpush1.xpose.msra.mxu0 0.0
    %1028 = vmatprep.subr.mxu0 0.0
    %1029 = vmatpush1.xpose.msra.mxu0 0.0
    %1030 = vmatprep.subr.mxu0 0.0
    %1031 = vmatpush1.xpose.msra.mxu0 0.0
    %1032 = vmatprep.subr.mxu0 0.0
    %1033 = vmatpush1.xpose.msra.mxu0 0.0
    %1034 = vmatprep.subr.mxu0 0.0
    %1035 = vmatpush1.xpose.msra.mxu0 0.0
    %1036 = vmatprep.subr.mxu0 0.0
    %1037 = vmatpush1.xpose.msra.mxu0 0.0
    %1038 = vmatprep.subr.mxu0 0.0
    %1039 = vmatpush1.xpose.msra.mxu0 0.0
    %1040 = vmatprep.subr.mxu0 0.0
    %1041 = vmatpush1.xpose.msra.mxu0 0.0
    %1042 = vmatprep.subr.mxu0 0.0
    %1043 = vmatpush1.xpose.msra.mxu0 0.0
    %1044 = vmatprep.subr.mxu0 0.0
    %1045 = vmatpush1.xpose.msra.mxu0 0.0
    %1046 = vmatprep.subr.mxu0 0.0
    %1047 = vmatpush1.xpose.msra.mxu0 0.0
    %1048 = vmatprep.subr.mxu0 0.0
    %1049 = vmatpush1.xpose.msra.mxu0 0.0
    %1050 = vmatprep.subr.mxu0 0.0
    %1051 = vmatpush1.xpose.msra.mxu0 0.0
    %1052 = vmatprep.subr.mxu0 0.0
    %1053 = vmatpush1.xpose.msra.mxu0 0.0
    %1054 = vmatprep.subr.mxu0 0.0
    %1055 = vmatpush1.xpose.msra.mxu0 0.0
    %1056 = vmatprep.subr.mxu0 0.0
    %1057 = vmatpush1.xpose.msra.mxu0 0.0
    %1058 = vmatprep.subr.mxu0 0.0
    %1059 = vmatpush1.xpose.msra.mxu0 0.0
    %1060 = vmatprep.subr.mxu0 0.0
    %1061 = vmatpush1.xpose.msra.mxu0 0.0
    %1062 = vmatprep.mubr.f32.mxu0 0.0
    %1063 = vmatmul.mubr.f32.gmra.mrb[0].mxu0 %v994
    %v1064 = vpop.f32.mrb[0].mxu0
    %v1065 = vadd.f32 %v824, %v1064
    %v1066 = vpop.f32.mrb[0].mxu0
    %1067 = vdwg.mxu0
    %v1068 = vsel %vm143, %v1065, -inf
    %1069 = vmax.xlane.f32.xlu0 %v1068
    %v1070 = vpop.xlane.xlu0 %1069
    %v1071 = vsub.f32 %v1065, %v1070
    %v1072 = vmul.f32 %v1071, 1.442695
    %v1073 = vpow.pop %v1072
    %v1074 = vsel %vm143, %v1073, 0.0
    %1075 = vadd.xlane.f32.xlu0 %v1074
    %v1076 = vpop.xlane.xlu0 %1075
    %v1077 = vrcp.pop %v1076
    %v1078 = vmul.f32 %v1073, %v1077
    %1079 = vrot.lane.b32.xlu0 %v131, 56
    %v1080 = vpop.permute.xlu0 %1079
    %v1083 = vsel %vm143, %v1078, 0
    %1085 = vmatprep.subr.mxu0 0.0
    %1086 = vmatpush1.msra.mxu0 %v1080
    %1087 = vmatprep.subr.mxu0 0.0
    %1088 = vmatpush1.msra.mxu0 0.0
    %1089 = vmatprep.subr.mxu0 0.0
    %1090 = vmatpush1.msra.mxu0 0.0
    %1091 = vmatprep.subr.mxu0 0.0
    %1092 = vmatpush1.msra.mxu0 0.0
    %1093 = vmatprep.subr.mxu0 0.0
    %1094 = vmatpush1.msra.mxu0 0.0
    %1095 = vmatprep.subr.mxu0 0.0
    %1096 = vmatpush1.msra.mxu0 0.0
    %1097 = vmatprep.subr.mxu0 0.0
    %1098 = vmatpush1.msra.mxu0 0.0
    %1099 = vmatprep.subr.mxu0 0.0
    %1100 = vmatpush1.msra.mxu0 0.0
    %1101 = vmatprep.subr.mxu0 0.0
    %1102 = vmatpush1.msra.mxu0 0.0
    %1103 = vmatprep.subr.mxu0 0.0
    %1104 = vmatpush1.msra.mxu0 0.0
    %1105 = vmatprep.subr.mxu0 0.0
    %1106 = vmatpush1.msra.mxu0 0.0
    %1107 = vmatprep.subr.mxu0 0.0
    %1108 = vmatpush1.msra.mxu0 0.0
    %1109 = vmatprep.subr.mxu0 0.0
    %1110 = vmatpush1.msra.mxu0 0.0
    %1111 = vmatprep.subr.mxu0 0.0
    %1112 = vmatpush1.msra.mxu0 0.0
    %1113 = vmatprep.subr.mxu0 0.0
    %1114 = vmatpush1.msra.mxu0 0.0
    %1115 = vmatprep.subr.mxu0 0.0
    %1116 = vmatpush1.msra.mxu0 0.0
    %1117 = vmatprep.subr.mxu0 0.0
    %1118 = vmatpush1.msra.mxu0 0.0
    %1119 = vmatprep.subr.mxu0 0.0
    %1120 = vmatpush1.msra.mxu0 0.0
    %1121 = vmatprep.subr.mxu0 0.0
    %1122 = vmatpush1.msra.mxu0 0.0
    %1123 = vmatprep.subr.mxu0 0.0
    %1124 = vmatpush1.msra.mxu0 0.0
    %1125 = vmatprep.subr.mxu0 0.0
    %1126 = vmatpush1.msra.mxu0 0.0
    %1127 = vmatprep.subr.mxu0 0.0
    %1128 = vmatpush1.msra.mxu0 0.0
    %1129 = vmatprep.subr.mxu0 0.0
    %1130 = vmatpush1.msra.mxu0 0.0
    %1131 = vmatprep.subr.mxu0 0.0
    %1132 = vmatpush1.msra.mxu0 0.0
    %1133 = vmatprep.subr.mxu0 0.0
    %1134 = vmatpush1.msra.mxu0 0.0
    %1135 = vmatprep.subr.mxu0 0.0
    %1136 = vmatpush1.msra.mxu0 0.0
    %1137 = vmatprep.subr.mxu0 0.0
    %1138 = vmatpush1.msra.mxu0 0.0
    %1139 = vmatprep.subr.mxu0 0.0
    %1140 = vmatpush1.msra.mxu0 0.0
    %1141 = vmatprep.subr.mxu0 0.0
    %1142 = vmatpush1.msra.mxu0 0.0
    %1143 = vmatprep.subr.mxu0 0.0
    %1144 = vmatpush1.msra.mxu0 0.0
    %1145 = vmatprep.subr.mxu0 0.0
    %1146 = vmatpush1.msra.mxu0 0.0
    %1147 = vmatprep.subr.mxu0 0.0
    %1148 = vmatpush1.msra.mxu0 0.0
    %1149 = vmatprep.mubr.f32.mxu0 0.0
    %1150 = vmatmul.mubr.f32.gmra.mrb[0].mxu0 %v1083
    %v1151 = vpop.f32.mrb[0].mxu0
    %v1152 = vadd.f32 0.0, %v1151
    %v1153 = vpop.f32.mrb[0].mxu0
    %1154 = vdwg.mxu0
    %1156 = vrot.lane.b32.xlu0 %v1152, 8
    %v1157 = vpop.permute.xlu0 %1156
    %1159 = vst.msk [vmem:[#allocation2 + $0x8] sm:$0xff] %vm475, %v1157
    %1160 = vrot.lane.b32.xlu0 %v131, 112
    %v1161 = vpop.permute.xlu0 %1160
    %1162 = vrot.lane.b32.xlu0 %v131, 80
    %v1163 = vpop.permute.xlu0 %1162
    %v1164 = vsel %vm143, %v1161, 0
    %v1166 = vsel %vm143, %v1163, 0
    %1168 = vmatprep.subr.mxu0 0.0
    %1169 = vmatpush1.xpose.msra.mxu0 %v1166
    %1170 = vmatprep.subr.mxu0 0.0
    %1171 = vmatpush1.xpose.msra.mxu0 0.0
    %1172 = vmatprep.subr.mxu0 0.0
    %1173 = vmatpush1.xpose.msra.mxu0 0.0
    %1174 = vmatprep.subr.mxu0 0.0
    %1175 = vmatpush1.xpose.msra.mxu0 0.0
    %1176 = vmatprep.subr.mxu0 0.0
    %1177 = vmatpush1.xpose.msra.mxu0 0.0
    %1178 = vmatprep.subr.mxu0 0.0
    %1179 = vmatpush1.xpose.msra.mxu0 0.0
    %1180 = vmatprep.subr.mxu0 0.0
    %1181 = vmatpush1.xpose.msra.mxu0 0.0
    %1182 = vmatprep.subr.mxu0 0.0
    %1183 = vmatpush1.xpose.msra.mxu0 0.0
    %1184 = vmatprep.subr.mxu0 0.0
    %1185 = vmatpush1.xpose.msra.mxu0 0.0
    %1186 = vmatprep.subr.mxu0 0.0
    %1187 = vmatpush1.xpose.msra.mxu0 0.0
    %1188 = vmatprep.subr.mxu0 0.0
    %1189 = vmatpush1.xpose.msra.mxu0 0.0
    %1190 = vmatprep.subr.mxu0 0.0
    %1191 = vmatpush1.xpose.msra.mxu0 0.0
    %1192 = vmatprep.subr.mxu0 0.0
    %1193 = vmatpush1.xpose.msra.mxu0 0.0
    %1194 = vmatprep.subr.mxu0 0.0
    %1195 = vmatpush1.xpose.msra.mxu0 0.0
    %1196 = vmatprep.subr.mxu0 0.0
    %1197 = vmatpush1.xpose.msra.mxu0 0.0
    %1198 = vmatprep.subr.mxu0 0.0
    %1199 = vmatpush1.xpose.msra.mxu0 0.0
    %1200 = vmatprep.subr.mxu0 0.0
    %1201 = vmatpush1.xpose.msra.mxu0 0.0
    %1202 = vmatprep.subr.mxu0 0.0
    %1203 = vmatpush1.xpose.msra.mxu0 0.0
    %1204 = vmatprep.subr.mxu0 0.0
    %1205 = vmatpush1.xpose.msra.mxu0 0.0
    %1206 = vmatprep.subr.mxu0 0.0
    %1207 = vmatpush1.xpose.msra.mxu0 0.0
    %1208 = vmatprep.subr.mxu0 0.0
    %1209 = vmatpush1.xpose.msra.mxu0 0.0
    %1210 = vmatprep.subr.mxu0 0.0
    %1211 = vmatpush1.xpose.msra.mxu0 0.0
    %1212 = vmatprep.subr.mxu0 0.0
    %1213 = vmatpush1.xpose.msra.mxu0 0.0
    %1214 = vmatprep.subr.mxu0 0.0
    %1215 = vmatpush1.xpose.msra.mxu0 0.0
    %1216 = vmatprep.subr.mxu0 0.0
    %1217 = vmatpush1.xpose.msra.mxu0 0.0
    %1218 = vmatprep.subr.mxu0 0.0
    %1219 = vmatpush1.xpose.msra.mxu0 0.0
    %1220 = vmatprep.subr.mxu0 0.0
    %1221 = vmatpush1.xpose.msra.mxu0 0.0
    %1222 = vmatprep.subr.mxu0 0.0
    %1223 = vmatpush1.xpose.msra.mxu0 0.0
    %1224 = vmatprep.subr.mxu0 0.0
    %1225 = vmatpush1.xpose.msra.mxu0 0.0
    %1226 = vmatprep.subr.mxu0 0.0
    %1227 = vmatpush1.xpose.msra.mxu0 0.0
    %1228 = vmatprep.subr.mxu0 0.0
    %1229 = vmatpush1.xpose.msra.mxu0 0.0
    %1230 = vmatprep.subr.mxu0 0.0
    %1231 = vmatpush1.xpose.msra.mxu0 0.0
    %1232 = vmatprep.mubr.f32.mxu0 0.0
    %1233 = vmatmul.mubr.f32.gmra.mrb[0].mxu0 %v1164
    %v1234 = vpop.f32.mrb[0].mxu0
    %v1235 = vadd.f32 %v824, %v1234
    %v1236 = vpop.f32.mrb[0].mxu0
    %1237 = vdwg.mxu0
    %v1238 = vsel %vm143, %v1235, -inf
    %1239 = vmax.xlane.f32.xlu0 %v1238
    %v1240 = vpop.xlane.xlu0 %1239
    %v1241 = vsub.f32 %v1235, %v1240
    %v1242 = vmul.f32 %v1241, 1.442695
    %v1243 = vpow.pop %v1242
    %v1244 = vsel %vm143, %v1243, 0.0
    %1245 = vadd.xlane.f32.xlu0 %v1244
    %v1246 = vpop.xlane.xlu0 %1245
    %v1247 = vrcp.pop %v1246
    %v1248 = vmul.f32 %v1243, %v1247
    %1249 = vrot.lane.b32.xlu0 %v131, 48
    %v1250 = vpop.permute.xlu0 %1249
    %v1253 = vsel %vm143, %v1248, 0
    %1255 = vmatprep.subr.mxu0 0.0
    %1256 = vmatpush1.msra.mxu0 %v1250
    %1257 = vmatprep.subr.mxu0 0.0
    %1258 = vmatpush1.msra.mxu0 0.0
    %1259 = vmatprep.subr.mxu0 0.0
    %1260 = vmatpush1.msra.mxu0 0.0
    %1261 = vmatprep.subr.mxu0 0.0
    %1262 = vmatpush1.msra.mxu0 0.0
    %1263 = vmatprep.subr.mxu0 0.0
    %1264 = vmatpush1.msra.mxu0 0.0
    %1265 = vmatprep.subr.mxu0 0.0
    %1266 = vmatpush1.msra.mxu0 0.0
    %1267 = vmatprep.subr.mxu0 0.0
    %1268 = vmatpush1.msra.mxu0 0.0
    %1269 = vmatprep.subr.mxu0 0.0
    %1270 = vmatpush1.msra.mxu0 0.0
    %1271 = vmatprep.subr.mxu0 0.0
    %1272 = vmatpush1.msra.mxu0 0.0
    %1273 = vmatprep.subr.mxu0 0.0
    %1274 = vmatpush1.msra.mxu0 0.0
    %1275 = vmatprep.subr.mxu0 0.0
    %1276 = vmatpush1.msra.mxu0 0.0
    %1277 = vmatprep.subr.mxu0 0.0
    %1278 = vmatpush1.msra.mxu0 0.0
    %1279 = vmatprep.subr.mxu0 0.0
    %1280 = vmatpush1.msra.mxu0 0.0
    %1281 = vmatprep.subr.mxu0 0.0
    %1282 = vmatpush1.msra.mxu0 0.0
    %1283 = vmatprep.subr.mxu0 0.0
    %1284 = vmatpush1.msra.mxu0 0.0
    %1285 = vmatprep.subr.mxu0 0.0
    %1286 = vmatpush1.msra.mxu0 0.0
    %1287 = vmatprep.subr.mxu0 0.0
    %1288 = vmatpush1.msra.mxu0 0.0
    %1289 = vmatprep.subr.mxu0 0.0
    %1290 = vmatpush1.msra.mxu0 0.0
    %1291 = vmatprep.subr.mxu0 0.0
    %1292 = vmatpush1.msra.mxu0 0.0
    %1293 = vmatprep.subr.mxu0 0.0
    %1294 = vmatpush1.msra.mxu0 0.0
    %1295 = vmatprep.subr.mxu0 0.0
    %1296 = vmatpush1.msra.mxu0 0.0
    %1297 = vmatprep.subr.mxu0 0.0
    %1298 = vmatpush1.msra.mxu0 0.0
    %1299 = vmatprep.subr.mxu0 0.0
    %1300 = vmatpush1.msra.mxu0 0.0
    %1301 = vmatprep.subr.mxu0 0.0
    %1302 = vmatpush1.msra.mxu0 0.0
    %1303 = vmatprep.subr.mxu0 0.0
    %1304 = vmatpush1.msra.mxu0 0.0
    %1305 = vmatprep.subr.mxu0 0.0
    %1306 = vmatpush1.msra.mxu0 0.0
    %1307 = vmatprep.subr.mxu0 0.0
    %1308 = vmatpush1.msra.mxu0 0.0
    %1309 = vmatprep.subr.mxu0 0.0
    %1310 = vmatpush1.msra.mxu0 0.0
    %1311 = vmatprep.subr.mxu0 0.0
    %1312 = vmatpush1.msra.mxu0 0.0
    %1313 = vmatprep.subr.mxu0 0.0
    %1314 = vmatpush1.msra.mxu0 0.0
    %1315 = vmatprep.subr.mxu0 0.0
    %1316 = vmatpush1.msra.mxu0 0.0
    %1317 = vmatprep.subr.mxu0 0.0
    %1318 = vmatpush1.msra.mxu0 0.0
    %1319 = vmatprep.mubr.f32.mxu0 0.0
    %1320 = vmatmul.mubr.f32.gmra.mrb[0].mxu0 %v1253
    %v1321 = vpop.f32.mrb[0].mxu0
    %v1322 = vadd.f32 0.0, %v1321
    %v1323 = vpop.f32.mrb[0].mxu0
    %1324 = vdwg.mxu0
    %1326 = vrot.lane.b32.xlu0 %v1322, 16
    %v1327 = vpop.permute.xlu0 %1326
    %1329 = vst.msk [vmem:[#allocation2 + $0x8] sm:$0xff] %vm646, %v1327
    %1330 = vrot.lane.b32.xlu0 %v131, 104
    %v1331 = vpop.permute.xlu0 %1330
    %1332 = vrot.lane.b32.xlu0 %v131, 72
    %v1333 = vpop.permute.xlu0 %1332
    %v1334 = vsel %vm143, %v1331, 0
    %v1336 = vsel %vm143, %v1333, 0
    %1338 = vmatprep.subr.mxu0 0.0
    %1339 = vmatpush1.xpose.msra.mxu0 %v1336
    %1340 = vmatprep.subr.mxu0 0.0
    %1341 = vmatpush1.xpose.msra.mxu0 0.0
    %1342 = vmatprep.subr.mxu0 0.0
    %1343 = vmatpush1.xpose.msra.mxu0 0.0
    %1344 = vmatprep.subr.mxu0 0.0
    %1345 = vmatpush1.xpose.msra.mxu0 0.0
    %1346 = vmatprep.subr.mxu0 0.0
    %1347 = vmatpush1.xpose.msra.mxu0 0.0
    %1348 = vmatprep.subr.mxu0 0.0
    %1349 = vmatpush1.xpose.msra.mxu0 0.0
    %1350 = vmatprep.subr.mxu0 0.0
    %1351 = vmatpush1.xpose.msra.mxu0 0.0
    %1352 = vmatprep.subr.mxu0 0.0
    %1353 = vmatpush1.xpose.msra.mxu0 0.0
    %1354 = vmatprep.subr.mxu0 0.0
    %1355 = vmatpush1.xpose.msra.mxu0 0.0
    %1356 = vmatprep.subr.mxu0 0.0
    %1357 = vmatpush1.xpose.msra.mxu0 0.0
    %1358 = vmatprep.subr.mxu0 0.0
    %1359 = vmatpush1.xpose.msra.mxu0 0.0
    %1360 = vmatprep.subr.mxu0 0.0
    %1361 = vmatpush1.xpose.msra.mxu0 0.0
    %1362 = vmatprep.subr.mxu0 0.0
    %1363 = vmatpush1.xpose.msra.mxu0 0.0
    %1364 = vmatprep.subr.mxu0 0.0
    %1365 = vmatpush1.xpose.msra.mxu0 0.0
    %1366 = vmatprep.subr.mxu0 0.0
    %1367 = vmatpush1.xpose.msra.mxu0 0.0
    %1368 = vmatprep.subr.mxu0 0.0
    %1369 = vmatpush1.xpose.msra.mxu0 0.0
    %1370 = vmatprep.subr.mxu0 0.0
    %1371 = vmatpush1.xpose.msra.mxu0 0.0
    %1372 = vmatprep.subr.mxu0 0.0
    %1373 = vmatpush1.xpose.msra.mxu0 0.0
    %1374 = vmatprep.subr.mxu0 0.0
    %1375 = vmatpush1.xpose.msra.mxu0 0.0
    %1376 = vmatprep.subr.mxu0 0.0
    %1377 = vmatpush1.xpose.msra.mxu0 0.0
    %1378 = vmatprep.subr.mxu0 0.0
    %1379 = vmatpush1.xpose.msra.mxu0 0.0
    %1380 = vmatprep.subr.mxu0 0.0
    %1381 = vmatpush1.xpose.msra.mxu0 0.0
    %1382 = vmatprep.subr.mxu0 0.0
    %1383 = vmatpush1.xpose.msra.mxu0 0.0
    %1384 = vmatprep.subr.mxu0 0.0
    %1385 = vmatpush1.xpose.msra.mxu0 0.0
    %1386 = vmatprep.subr.mxu0 0.0
    %1387 = vmatpush1.xpose.msra.mxu0 0.0
    %1388 = vmatprep.subr.mxu0 0.0
    %1389 = vmatpush1.xpose.msra.mxu0 0.0
    %1390 = vmatprep.subr.mxu0 0.0
    %1391 = vmatpush1.xpose.msra.mxu0 0.0
    %1392 = vmatprep.subr.mxu0 0.0
    %1393 = vmatpush1.xpose.msra.mxu0 0.0
    %1394 = vmatprep.subr.mxu0 0.0
    %1395 = vmatpush1.xpose.msra.mxu0 0.0
    %1396 = vmatprep.subr.mxu0 0.0
    %1397 = vmatpush1.xpose.msra.mxu0 0.0
    %1398 = vmatprep.subr.mxu0 0.0
    %1399 = vmatpush1.xpose.msra.mxu0 0.0
    %1400 = vmatprep.subr.mxu0 0.0
    %1401 = vmatpush1.xpose.msra.mxu0 0.0
    %1402 = vmatprep.mubr.f32.mxu0 0.0
    %1403 = vmatmul.mubr.f32.gmra.mrb[0].mxu0 %v1334
    %v1404 = vpop.f32.mrb[0].mxu0
    %v1405 = vadd.f32 %v824, %v1404
    %v1406 = vpop.f32.mrb[0].mxu0
    %1407 = vdwg.mxu0
    %v1408 = vsel %vm143, %v1405, -inf
    %1409 = vmax.xlane.f32.xlu0 %v1408
    %v1410 = vpop.xlane.xlu0 %1409
    %v1411 = vsub.f32 %v1405, %v1410
    %v1412 = vmul.f32 %v1411, 1.442695
    %v1413 = vpow.pop %v1412
    %v1414 = vsel %vm143, %v1413, 0.0
    %1415 = vadd.xlane.f32.xlu0 %v1414
    %v1416 = vpop.xlane.xlu0 %1415
    %v1417 = vrcp.pop %v1416
    %v1418 = vmul.f32 %v1413, %v1417
    %1419 = vrot.lane.b32.xlu0 %v131, 40
    %v1420 = vpop.permute.xlu0 %1419
    %v1423 = vsel %vm143, %v1418, 0
    %1425 = vmatprep.subr.mxu0 0.0
    %1426 = vmatpush1.msra.mxu0 %v1420
    %1427 = vmatprep.subr.mxu0 0.0
    %1428 = vmatpush1.msra.mxu0 0.0
    %1429 = vmatprep.subr.mxu0 0.0
    %1430 = vmatpush1.msra.mxu0 0.0
    %1431 = vmatprep.subr.mxu0 0.0
    %1432 = vmatpush1.msra.mxu0 0.0
    %1433 = vmatprep.subr.mxu0 0.0
    %1434 = vmatpush1.msra.mxu0 0.0
    %1435 = vmatprep.subr.mxu0 0.0
    %1436 = vmatpush1.msra.mxu0 0.0
    %1437 = vmatprep.subr.mxu0 0.0
    %1438 = vmatpush1.msra.mxu0 0.0
    %1439 = vmatprep.subr.mxu0 0.0
    %1440 = vmatpush1.msra.mxu0 0.0
    %1441 = vmatprep.subr.mxu0 0.0
    %1442 = vmatpush1.msra.mxu0 0.0
    %1443 = vmatprep.subr.mxu0 0.0
    %1444 = vmatpush1.msra.mxu0 0.0
    %1445 = vmatprep.subr.mxu0 0.0
    %1446 = vmatpush1.msra.mxu0 0.0
    %1447 = vmatprep.subr.mxu0 0.0
    %1448 = vmatpush1.msra.mxu0 0.0
    %1449 = vmatprep.subr.mxu0 0.0
    %1450 = vmatpush1.msra.mxu0 0.0
    %1451 = vmatprep.subr.mxu0 0.0
    %1452 = vmatpush1.msra.mxu0 0.0
    %1453 = vmatprep.subr.mxu0 0.0
    %1454 = vmatpush1.msra.mxu0 0.0
    %1455 = vmatprep.subr.mxu0 0.0
    %1456 = vmatpush1.msra.mxu0 0.0
    %1457 = vmatprep.subr.mxu0 0.0
    %1458 = vmatpush1.msra.mxu0 0.0
    %1459 = vmatprep.subr.mxu0 0.0
    %1460 = vmatpush1.msra.mxu0 0.0
    %1461 = vmatprep.subr.mxu0 0.0
    %1462 = vmatpush1.msra.mxu0 0.0
    %1463 = vmatprep.subr.mxu0 0.0
    %1464 = vmatpush1.msra.mxu0 0.0
    %1465 = vmatprep.subr.mxu0 0.0
    %1466 = vmatpush1.msra.mxu0 0.0
    %1467 = vmatprep.subr.mxu0 0.0
    %1468 = vmatpush1.msra.mxu0 0.0
    %1469 = vmatprep.subr.mxu0 0.0
    %1470 = vmatpush1.msra.mxu0 0.0
    %1471 = vmatprep.subr.mxu0 0.0
    %1472 = vmatpush1.msra.mxu0 0.0
    %1473 = vmatprep.subr.mxu0 0.0
    %1474 = vmatpush1.msra.mxu0 0.0
    %1475 = vmatprep.subr.mxu0 0.0
    %1476 = vmatpush1.msra.mxu0 0.0
    %1477 = vmatprep.subr.mxu0 0.0
    %1478 = vmatpush1.msra.mxu0 0.0
    %1479 = vmatprep.subr.mxu0 0.0
    %1480 = vmatpush1.msra.mxu0 0.0
    %1481 = vmatprep.subr.mxu0 0.0
    %1482 = vmatpush1.msra.mxu0 0.0
    %1483 = vmatprep.subr.mxu0 0.0
    %1484 = vmatpush1.msra.mxu0 0.0
    %1485 = vmatprep.subr.mxu0 0.0
    %1486 = vmatpush1.msra.mxu0 0.0
    %1487 = vmatprep.subr.mxu0 0.0
    %1488 = vmatpush1.msra.mxu0 0.0
    %1489 = vmatprep.mubr.f32.mxu0 0.0
    %1490 = vmatmul.mubr.f32.gmra.mrb[0].mxu0 %v1423
    %v1491 = vpop.f32.mrb[0].mxu0
    %v1492 = vadd.f32 0.0, %v1491
    %v1493 = vpop.f32.mrb[0].mxu0
    %1494 = vdwg.mxu0
    %1496 = vrot.lane.b32.xlu0 %v1492, 24
    %v1497 = vpop.permute.xlu0 %1496
    %1499 = vst.msk [vmem:[#allocation2 + $0x8] sm:$0xff] %vm817, %v1497
    %v1500 = vld [vmem:[#allocation2] sm:$0xff]
    %v1501 = vld [vmem:[#allocation2 + $0x8] sm:$0xff]
    %v1502 = vld [vmem:[%s3] sm:$0xff]
    %v1503 = vld [vmem:[%s3 + $0x8] sm:$0xff]
    %v1504 = vld [vmem:[%s3 + $0x10] sm:$0xff]
    %v1505 = vld [vmem:[%s3 + $0x18] sm:$0xff]
    %v1506 = vlaneseq
    %v1507 = vshrl.u32 %v1506, 7
    %v1508 = vsub.s32 1, %v1507
    %v1509 = vrot.slane %v43, %v1508
    %v1511 = vsel %vm52, %v1500, 0
    %v1514 = vsel %vm52, %v1501, 0
    %1516 = vmatprep.subr.mxu0 0.0
    %1517 = vmatpush1.msra.mxu0 %v1502
    %1518 = vmatprep.subr.mxu0 0.0
    %1519 = vmatpush1.msra.mxu0 %v1503
    %1520 = vmatprep.subr.mxu0 0.0
    %1521 = vmatpush1.msra.mxu0 %v1504
    %1522 = vmatprep.subr.mxu0 0.0
    %1523 = vmatpush1.msra.mxu0 %v1505
    %1524 = vmatprep.subr.mxu0 0.0
    %1525 = vmatpush1.msra.mxu0 0.0
    %1526 = vmatprep.subr.mxu0 0.0
    %1527 = vmatpush1.msra.mxu0 0.0
    %1528 = vmatprep.subr.mxu0 0.0
    %1529 = vmatpush1.msra.mxu0 0.0
    %1530 = vmatprep.subr.mxu0 0.0
    %1531 = vmatpush1.msra.mxu0 0.0
    %1532 = vmatprep.subr.mxu0 0.0
    %1533 = vmatpush1.msra.mxu0 0.0
    %1534 = vmatprep.subr.mxu0 0.0
    %1535 = vmatpush1.msra.mxu0 0.0
    %1536 = vmatprep.subr.mxu0 0.0
    %1537 = vmatpush1.msra.mxu0 0.0
    %1538 = vmatprep.subr.mxu0 0.0
    %1539 = vmatpush1.msra.mxu0 0.0
    %1540 = vmatprep.subr.mxu0 0.0
    %1541 = vmatpush1.msra.mxu0 0.0
    %1542 = vmatprep.subr.mxu0 0.0
    %1543 = vmatpush1.msra.mxu0 0.0
    %1544 = vmatprep.subr.mxu0 0.0
    %1545 = vmatpush1.msra.mxu0 0.0
    %1546 = vmatprep.subr.mxu0 0.0
    %1547 = vmatpush1.msra.mxu0 0.0
    %1548 = vmatprep.subr.mxu0 0.0
    %1549 = vmatpush1.msra.mxu0 0.0
    %1550 = vmatprep.subr.mxu0 0.0
    %1551 = vmatpush1.msra.mxu0 0.0
    %1552 = vmatprep.subr.mxu0 0.0
    %1553 = vmatpush1.msra.mxu0 0.0
    %1554 = vmatprep.subr.mxu0 0.0
    %1555 = vmatpush1.msra.mxu0 0.0
    %1556 = vmatprep.subr.mxu0 0.0
    %1557 = vmatpush1.msra.mxu0 0.0
    %1558 = vmatprep.subr.mxu0 0.0
    %1559 = vmatpush1.msra.mxu0 0.0
    %1560 = vmatprep.subr.mxu0 0.0
    %1561 = vmatpush1.msra.mxu0 0.0
    %1562 = vmatprep.subr.mxu0 0.0
    %1563 = vmatpush1.msra.mxu0 0.0
    %1564 = vmatprep.subr.mxu0 0.0
    %1565 = vmatpush1.msra.mxu0 0.0
    %1566 = vmatprep.subr.mxu0 0.0
    %1567 = vmatpush1.msra.mxu0 0.0
    %1568 = vmatprep.subr.mxu0 0.0
    %1569 = vmatpush1.msra.mxu0 0.0
    %1570 = vmatprep.subr.mxu0 0.0
    %1571 = vmatpush1.msra.mxu0 0.0
    %1572 = vmatprep.subr.mxu0 0.0
    %1573 = vmatpush1.msra.mxu0 0.0
    %1574 = vmatprep.subr.mxu0 0.0
    %1575 = vmatpush1.msra.mxu0 0.0
    %1576 = vmatprep.subr.mxu0 0.0
    %1577 = vmatpush1.msra.mxu0 0.0
    %1578 = vmatprep.subr.mxu0 0.0
    %1579 = vmatpush1.msra.mxu0 0.0
    %1580 = vmatprep.mubr.f32.mxu0 0.0
    %1581 = vmatmul.mubr.f32.gmra.mrb[0].mxu0 %v1511
    %v1582 = vpop.f32.mrb[0].mxu0
    %v1583 = vadd.f32 %v1509, %v1582
    %v1584 = vpop.f32.mrb[0].mxu0
    %1585 = vmatprep.mubr.f32.mxu0 0.0
    %1586 = vmatmul.mubr.f32.gmra.mrb[0].mxu0 %v1514
    %v1587 = vpop.f32.mrb[0].mxu0
    %v1588 = vadd.f32 %v1509, %v1587
    %v1589 = vpop.f32.mrb[0].mxu0
    %1590 = vdwg.mxu0
    %v1591 = vadd.f32 %v41, %v1583
    %v1592 = vadd.f32 %v42, %v1588
    %v1593 = vsel %vm52, %v1591, 0.0
    %1594 = vadd.xlane.f32.xlu0 %v1593
    %v1595 = vpop.xlane.xlu0 %1594
    %v1596 = vsel %vm52, %v1592, 0.0
    %1597 = vadd.xlane.f32.xlu0 %v1596
    %v1598 = vpop.xlane.xlu0 %1597
    %v1599 = vrcp.pop 32.0
    %v1600 = vmul.f32 %v1595, %v1599
    %v1601 = vmul.f32 %v1598, %v1599
    %v1602 = vsub.f32 %v1591, %v1600
    %v1603 = vsub.f32 %v1592, %v1601
    %v1604 = vmul.f32 %v1602, %v1602
    %v1605 = vmul.f32 %v1603, %v1603
    %v1606 = vsel %vm52, %v1604, 0.0
    %1607 = vadd.xlane.f32.xlu0 %v1606
    %v1608 = vpop.xlane.xlu0 %1607
    %v1609 = vsel %vm52, %v1605, 0.0
    %1610 = vadd.xlane.f32.xlu0 %v1609
    %v1611 = vpop.xlane.xlu0 %1610
    %v1612 = vmul.f32 %v1608, %v1599
    %v1613 = vmul.f32 %v1611, %v1599
    %v1614 = vadd.f32 %v1612, 1e-05
    %v1615 = vadd.f32 %v1613, 1e-05
    %v1616 = vrsqrt.pop %v1614
    %v1617 = vrsqrt.pop %v1615
    %v1618 = vmul.f32 %v1602, %v1616
    %v1619 = vmul.f32 %v1603, %v1617
    %v1620 = vlaneseq
    %v1621 = vshrl.u32 %v1620, 7
    %v1622 = vsub.s32 4, %v1621
    %v1623 = vrot.slane %v43, %v1622
    %v1624 = vmul.f32 %v1618, %v1623
    %v1625 = vmul.f32 %v1619, %v1623
    %v1626 = vlaneseq
    %v1627 = vshrl.u32 %v1626, 7
    %v1628 = vsub.s32 5, %v1627
    %v1629 = vrot.slane %v43, %v1628
    %v1630 = vadd.f32 %v1624, %v1629
    %v1631 = vadd.f32 %v1625, %v1629
    %v1632 = vld [vmem:[%s4] sm:$0xff]
    %v1633 = vld [vmem:[%s4 + $0x8] sm:$0xff]
    %v1634 = vld [vmem:[%s4 + $0x10] sm:$0xff]
    %v1635 = vld [vmem:[%s4 + $0x18] sm:$0xff]
    %v1636 = vlaneseq
    %v1637 = vshrl.u32 %v1636, 7
    %v1638 = vsub.s32 2, %v1637
    %v1639 = vrot.slane %v43, %v1638
    %v1641 = vsel %vm52, %v1630, 0
    %v1644 = vsel %vm52, %v1631, 0
    %1646 = vmatprep.subr.mxu0 0.0
    %1647 = vmatpush1.msra.mxu0 %v1632
    %1648 = vmatprep.subr.mxu0 0.0
    %1649 = vmatpush1.msra.mxu0 %v1633
    %1650 = vmatprep.subr.mxu0 0.0
    %1651 = vmatpush1.msra.mxu0 %v1634
    %1652 = vmatprep.subr.mxu0 0.0
    %1653 = vmatpush1.msra.mxu0 %v1635
    %1654 = vmatprep.subr.mxu0 0.0
    %1655 = vmatpush1.msra.mxu0 0.0
    %1656 = vmatprep.subr.mxu0 0.0
    %1657 = vmatpush1.msra.mxu0 0.0
    %1658 = vmatprep.subr.mxu0 0.0
    %1659 = vmatpush1.msra.mxu0 0.0
    %1660 = vmatprep.subr.mxu0 0.0
    %1661 = vmatpush1.msra.mxu0 0.0
    %1662 = vmatprep.subr.mxu0 0.0
    %1663 = vmatpush1.msra.mxu0 0.0
    %1664 = vmatprep.subr.mxu0 0.0
    %1665 = vmatpush1.msra.mxu0 0.0
    %1666 = vmatprep.subr.mxu0 0.0
    %1667 = vmatpush1.msra.mxu0 0.0
    %1668 = vmatprep.subr.mxu0 0.0
    %1669 = vmatpush1.msra.mxu0 0.0
    %1670 = vmatprep.subr.mxu0 0.0
    %1671 = vmatpush1.msra.mxu0 0.0
    %1672 = vmatprep.subr.mxu0 0.0
    %1673 = vmatpush1.msra.mxu0 0.0
    %1674 = vmatprep.subr.mxu0 0.0
    %1675 = vmatpush1.msra.mxu0 0.0
    %1676 = vmatprep.subr.mxu0 0.0
    %1677 = vmatpush1.msra.mxu0 0.0
    %1678 = vmatprep.subr.mxu0 0.0
    %1679 = vmatpush1.msra.mxu0 0.0
    %1680 = vmatprep.subr.mxu0 0.0
    %1681 = vmatpush1.msra.mxu0 0.0
    %1682 = vmatprep.subr.mxu0 0.0
    %1683 = vmatpush1.msra.mxu0 0.0
    %1684 = vmatprep.subr.mxu0 0.0
    %1685 = vmatpush1.msra.mxu0 0.0
    %1686 = vmatprep.subr.mxu0 0.0
    %1687 = vmatpush1.msra.mxu0 0.0
    %1688 = vmatprep.subr.mxu0 0.0
    %1689 = vmatpush1.msra.mxu0 0.0
    %1690 = vmatprep.subr.mxu0 0.0
    %1691 = vmatpush1.msra.mxu0 0.0
    %1692 = vmatprep.subr.mxu0 0.0
    %1693 = vmatpush1.msra.mxu0 0.0
    %1694 = vmatprep.subr.mxu0 0.0
    %1695 = vmatpush1.msra.mxu0 0.0
    %1696 = vmatprep.subr.mxu0 0.0
    %1697 = vmatpush1.msra.mxu0 0.0
    %1698 = vmatprep.subr.mxu0 0.0
    %1699 = vmatpush1.msra.mxu0 0.0
    %1700 = vmatprep.subr.mxu0 0.0
    %1701 = vmatpush1.msra.mxu0 0.0
    %1702 = vmatprep.subr.mxu0 0.0
    %1703 = vmatpush1.msra.mxu0 0.0
    %1704 = vmatprep.subr.mxu0 0.0
    %1705 = vmatpush1.msra.mxu0 0.0
    %1706 = vmatprep.subr.mxu0 0.0
    %1707 = vmatpush1.msra.mxu0 0.0
    %1708 = vmatprep.subr.mxu0 0.0
    %1709 = vmatpush1.msra.mxu0 0.0
    %1710 = vmatprep.mubr.f32.mxu0 0.0
    %1711 = vmatmul.mubr.f32.gmra.mrb[0].mxu0 %v1641
    %v1712 = vpop.f32.mrb[0].mxu0
    %v1713 = vadd.f32 %v1639, %v1712
    %v1714 = vpop.f32.mrb[0].mxu0
    %1715 = vmatprep.mubr.f32.mxu0 0.0
    %1716 = vmatmul.mubr.f32.gmra.mrb[0].mxu0 %v1644
    %v1717 = vpop.f32.mrb[0].mxu0
    %v1718 = vadd.f32 %v1639, %v1717
    %v1719 = vpop.f32.mrb[0].mxu0
    %1720 = vdwg.mxu0
    %v1721 = vmax.f32 %v1713, 0.0
    %v1722 = vmax.f32 %v1718, 0.0
    %v1723 = vld [vmem:[%s5] sm:$0xff]
    %v1724 = vld [vmem:[%s5 + $0x8] sm:$0xff]
    %v1725 = vld [vmem:[%s5 + $0x10] sm:$0xff]
    %v1726 = vld [vmem:[%s5 + $0x18] sm:$0xff]
    %v1727 = vld [vmem:[%s5 + $0x20] sm:$0xff]
    %v1728 = vld [vmem:[%s5 + $0x28] sm:$0xff]
    %v1729 = vld [vmem:[%s5 + $0x30] sm:$0xff]
    %v1730 = vld [vmem:[%s5 + $0x38] sm:$0xff]
    %v1731 = vlaneseq
    %v1732 = vshrl.u32 %v1731, 7
    %v1733 = vsub.s32 3, %v1732
    %v1734 = vrot.slane %v43, %v1733
    %vm1735 = vcmask 523264
    %v1737 = vsel %vm1735, %v1721, 0
    %v1740 = vsel %vm1735, %v1722, 0
    %1742 = vmatprep.subr.mxu0 0.0
    %1743 = vmatpush1.msra.mxu0 %v1723
    %1744 = vmatprep.subr.mxu0 0.0
    %1745 = vmatpush1.msra.mxu0 %v1724
    %1746 = vmatprep.subr.mxu0 0.0
    %1747 = vmatpush1.msra.mxu0 %v1725
    %1748 = vmatprep.subr.mxu0 0.0
    %1749 = vmatpush1.msra.mxu0 %v1726
    %1750 = vmatprep.subr.mxu0 0.0
    %1751 = vmatpush1.msra.mxu0 %v1727
    %1752 = vmatprep.subr.mxu0 0.0
    %1753 = vmatpush1.msra.mxu0 %v1728
    %1754 = vmatprep.subr.mxu0 0.0
    %1755 = vmatpush1.msra.mxu0 %v1729
    %1756 = vmatprep.subr.mxu0 0.0
    %1757 = vmatpush1.msra.mxu0 %v1730
    %1758 = vmatprep.subr.mxu0 0.0
    %1759 = vmatpush1.msra.mxu0 0.0
    %1760 = vmatprep.subr.mxu0 0.0
    %1761 = vmatpush1.msra.mxu0 0.0
    %1762 = vmatprep.subr.mxu0 0.0
    %1763 = vmatpush1.msra.mxu0 0.0
    %1764 = vmatprep.subr.mxu0 0.0
    %1765 = vmatpush1.msra.mxu0 0.0
    %1766 = vmatprep.subr.mxu0 0.0
    %1767 = vmatpush1.msra.mxu0 0.0
    %1768 = vmatprep.subr.mxu0 0.0
    %1769 = vmatpush1.msra.mxu0 0.0
    %1770 = vmatprep.subr.mxu0 0.0
    %1771 = vmatpush1.msra.mxu0 0.0
    %1772 = vmatprep.subr.mxu0 0.0
    %1773 = vmatpush1.msra.mxu0 0.0
    %1774 = vmatprep.subr.mxu0 0.0
    %1775 = vmatpush1.msra.mxu0 0.0
    %1776 = vmatprep.subr.mxu0 0.0
    %1777 = vmatpush1.msra.mxu0 0.0
    %1778 = vmatprep.subr.mxu0 0.0
    %1779 = vmatpush1.msra.mxu0 0.0
    %1780 = vmatprep.subr.mxu0 0.0
    %1781 = vmatpush1.msra.mxu0 0.0
    %1782 = vmatprep.subr.mxu0 0.0
    %1783 = vmatpush1.msra.mxu0 0.0
    %1784 = vmatprep.subr.mxu0 0.0
    %1785 = vmatpush1.msra.mxu0 0.0
    %1786 = vmatprep.subr.mxu0 0.0
    %1787 = vmatpush1.msra.mxu0 0.0
    %1788 = vmatprep.subr.mxu0 0.0
    %1789 = vmatpush1.msra.mxu0 0.0
    %1790 = vmatprep.subr.mxu0 0.0
    %1791 = vmatpush1.msra.mxu0 0.0
    %1792 = vmatprep.subr.mxu0 0.0
    %1793 = vmatpush1.msra.mxu0 0.0
    %1794 = vmatprep.subr.mxu0 0.0
    %1795 = vmatpush1.msra.mxu0 0.0
    %1796 = vmatprep.subr.mxu0 0.0
    %1797 = vmatpush1.msra.mxu0 0.0
    %1798 = vmatprep.subr.mxu0 0.0
    %1799 = vmatpush1.msra.mxu0 0.0
    %1800 = vmatprep.subr.mxu0 0.0
    %1801 = vmatpush1.msra.mxu0 0.0
    %1802 = vmatprep.subr.mxu0 0.0
    %1803 = vmatpush1.msra.mxu0 0.0
    %1804 = vmatprep.subr.mxu0 0.0
    %1805 = vmatpush1.msra.mxu0 0.0
    %1806 = vmatprep.mubr.f32.mxu0 0.0
    %1807 = vmatmul.mubr.f32.gmra.mrb[0].mxu0 %v1737
    %v1808 = vpop.f32.mrb[0].mxu0
    %v1809 = vadd.f32 %v1734, %v1808
    %v1810 = vpop.f32.mrb[0].mxu0
    %1811 = vmatprep.mubr.f32.mxu0 0.0
    %1812 = vmatmul.mubr.f32.gmra.mrb[0].mxu0 %v1740
    %v1813 = vpop.f32.mrb[0].mxu0
    %v1814 = vadd.f32 %v1734, %v1813
    %v1815 = vpop.f32.mrb[0].mxu0
    %1816 = vdwg.mxu0
    %v1817 = vadd.f32 %v1630, %v1809
    %v1818 = vadd.f32 %v1631, %v1814
    %v1819 = vsel %vm52, %v1817, 0.0
    %1820 = vadd.xlane.f32.xlu0 %v1819
    %v1821 = vpop.xlane.xlu0 %1820
    %v1822 = vsel %vm52, %v1818, 0.0
    %1823 = vadd.xlane.f32.xlu0 %v1822
    %v1824 = vpop.xlane.xlu0 %1823
    %v1825 = vmul.f32 %v1821, %v1599
    %v1826 = vmul.f32 %v1824, %v1599
    %v1827 = vsub.f32 %v1817, %v1825
    %v1828 = vsub.f32 %v1818, %v1826
    %v1829 = vmul.f32 %v1827, %v1827
    %v1830 = vmul.f32 %v1828, %v1828
    %v1831 = vsel %vm52, %v1829, 0.0
    %1832 = vadd.xlane.f32.xlu0 %v1831
    %v1833 = vpop.xlane.xlu0 %1832
    %v1834 = vsel %vm52, %v1830, 0.0
    %1835 = vadd.xlane.f32.xlu0 %v1834
    %v1836 = vpop.xlane.xlu0 %1835
    %v1837 = vmul.f32 %v1833, %v1599
    %v1838 = vmul.f32 %v1836, %v1599
    %v1839 = vadd.f32 %v1837, 1e-05
    %v1840 = vadd.f32 %v1838, 1e-05
    %v1841 = vrsqrt.pop %v1839
    %v1842 = vrsqrt.pop %v1840
    %v1843 = vmul.f32 %v1827, %v1841
    %v1844 = vmul.f32 %v1828, %v1842
    %v1845 = vlaneseq
    %v1846 = vshrl.u32 %v1845, 7
    %v1847 = vsub.s32 6, %v1846
    %v1848 = vrot.slane %v43, %v1847
    %v1849 = vmul.f32 %v1843, %v1848
    %v1850 = vmul.f32 %v1844, %v1848
    %v1851 = vlaneseq
    %v1852 = vshrl.u32 %v1851, 7
    %v1853 = vsub.s32 7, %v1852
    %v1854 = vrot.slane %v43, %v1853
    %v1855 = vadd.f32 %v1849, %v1854
    %v1856 = vadd.f32 %v1850, %v1854
    %1857 = vst.msk [vmem:[#allocation6] sm:$0xff] %vm52, %v1855
    %1858 = vst.msk [vmem:[#allocation6 + $0x8] sm:$0xff] %vm52, %v1856
    // Predicated region
    $region34: #{tpu_custom_call.1} parent=1 // pred_check
      _
    $region35: #{tpu_custom_call.1} parent=1 // pred_check_branch
      %1860 = sbr.rel (0) target = $region37
    $region36: #{tpu_custom_call.1} parent=1 // pred_region
      %s1862 = ssub.s32 256, 256
      %1863 = vsyncadd [#allocation5], %s1862
      %s1864 = sshll.u32 [#allocation6], 4
      %s1865 = int_to_ptr.vmem [resolvable:$true] %s1864
      %1870 = dma.vmem_to_hbm [thread:$0]  %s1865, 256, %s7, [#allocation5], 128, 128, 8
    $region37: #{tpu_custom_call.1} parent=1 // pred_fallthru
      _
    // Predicated region
    $region38: #{tpu_custom_call.1} parent=1 // pred_check
      _
    $region39: #{tpu_custom_call.1} parent=1 // pred_check_branch
      %1872 = sbr.rel (0) target = $region41
    $region40: #{tpu_custom_call.1} parent=1 // pred_region
      %1873 = dma.done [#allocation5], 256
    $region41: #{tpu_custom_call.1} parent=1 // pred_fallthru
      _
    %1874 = vsyncpa [#allocation4], 1
    %1875 = vsyncpa [#allocation5], 1

</llo_original>
